<compile_context>
chip_gen: v7x
topology: tpu7x:2x2x1
jax: 0.10.0
libtpu: 0.0.40
codegen_flags: <defaults>
</compile_context>

<pallas_src>
import jax
import jax.numpy as jnp
from jax.experimental import pallas as pl
from jax.experimental.pallas import tpu as pltpu  # noqa: F401  (TPU backend)


def se_gate_mul_kernel(xse_ref, w_ref, b_ref, x_ref, o_ref):
    # xse_ref: (Cin, 1)    squeezed SE input (column)
    # w_ref:   (Cout, Cin) 1x1 conv weight
    # b_ref:   (Cout, 1)   conv bias (column)
    # x_ref:   (Cout, P)   feature map, P = H*W (channels on sublanes)
    # o_ref:   (Cout, P)
    gate = jnp.dot(w_ref[...], xse_ref[...],
                   preferred_element_type=jnp.float32) + b_ref[...]
    gate = 1.0 / (1.0 + jnp.exp(-gate))            # sigmoid, (Cout, 1)
    # per-sublane gate, broadcast along the lane (spatial) axis
    o_ref[...] = (x_ref[...] * gate).astype(o_ref.dtype)


@jax.jit
def se_conv_sigmoid_mul(x129, x126, weight, bias):
    """x129: (N, Cin, 1, 1), x126: (N, Cout, H, W),
    weight: (Cout, Cin, 1, 1), bias: (Cout,). Returns (N, Cout, H, W)."""
    n, cin, _, _ = x129.shape
    _, cout, h, w = x126.shape
    assert n == 1, "kernel written for batch=1 (matches module)"

    xse = x129.reshape(cin, 1)               # (Cin, 1)
    wmat = weight.reshape(cout, cin)         # (Cout, Cin)
    bvec = bias.reshape(cout, 1)             # (Cout, 1)
    xmap = x126.reshape(cout, h * w)         # free row-major reshape, no copy

    p = h * w
    itemsize = jnp.dtype(x126.dtype).itemsize
    cost = pl.CostEstimate(
        flops=2 * cin * cout + cout * p,          # 1x1 conv + broadcast mul
        transcendentals=cout,                      # exp in sigmoid
        bytes_accessed=2 * cout * p * itemsize     # read + write feature map
        + cout * cin * 4 + cout * 4 + cin * 4,
    )

    out = pl.pallas_call(
        se_gate_mul_kernel,
        out_shape=jax.ShapeDtypeStruct((cout, p), x126.dtype),
        in_specs=[
            pl.BlockSpec(xse.shape, lambda: (0, 0)),
            pl.BlockSpec(wmat.shape, lambda: (0, 0)),
            pl.BlockSpec(bvec.shape, lambda: (0, 0)),
            pl.BlockSpec(xmap.shape, lambda: (0, 0)),
        ],
        out_specs=pl.BlockSpec((cout, p), lambda: (0, 0)),
        input_output_aliases={3: 0},               # feature map in -> out
        cost_estimate=cost,
    )(xse, wmat, bvec, xmap)

    # free reshape back to NCHW
    return out.reshape(n, cout, h, w)


def reference(x129, x126, weight, bias):
    # pure-JAX reference: 1x1 conv == channel matmul
    n, cin, _, _ = x129.shape
    cout = weight.shape[0]
    g = x129.reshape(n, cin) @ weight.reshape(cout, cin).T + bias
    g = jax.nn.sigmoid(g).reshape(n, cout, 1, 1)
    return g * x126


if __name__ == "__main__":
    key = jax.random.PRNGKey(0)
    k1, k2, k3, k4 = jax.random.split(key, 4)

    N, Cin, Cout, H, W = 1, 20, 480, 14, 14
    x129 = jax.random.normal(k1, (N, Cin, 1, 1), dtype=jnp.float32)
    x126 = jax.random.normal(k2, (N, Cout, H, W), dtype=jnp.float32)
    weight = jax.random.normal(k3, (Cout, Cin, 1, 1), dtype=jnp.float32) * 0.1
    bias = jax.random.normal(k4, (Cout,), dtype=jnp.float32) * 0.1

    out = se_conv_sigmoid_mul(x129, x126, weight, bias)
    out = jax.block_until_ready(out)

    ref = reference(x129, x126, weight, bias)
    assert out.shape == (N, Cout, H, W)
    assert jnp.allclose(out, ref, atol=1e-5, rtol=1e-5)
    print("KERNEL_OK")
</pallas_src>

<mosaic_0001>
module attributes {stable_mosaic.version = 11 : i64} {
  func.func @se_gate_mul_kernel(%arg0: memref<20x1xf32, #tpu.memory_space<vmem>>, %arg1: memref<480x20xf32, #tpu.memory_space<vmem>>, %arg2: memref<480x1xf32, #tpu.memory_space<vmem>>, %arg3: memref<480x196xf32, #tpu.memory_space<vmem>>, %arg4: memref<480x196xf32, #tpu.memory_space<vmem>>) attributes {dimension_semantics = [], scalar_prefetch = 0 : i64, scratch_operands = 0 : i64, tpu.core_type = #tpu.core_type<tc>} {
    %c0 = arith.constant 0 : index
    %c0_0 = arith.constant 0 : index
    %0 = vector.load %arg1[%c0, %c0_0] : memref<480x20xf32, #tpu.memory_space<vmem>>, vector<480x20xf32>
    %c0_1 = arith.constant 0 : index
    %c0_2 = arith.constant 0 : index
    %1 = vector.load %arg0[%c0_1, %c0_2] : memref<20x1xf32, #tpu.memory_space<vmem>>, vector<20x1xf32>
    %cst = arith.constant dense<0.000000e+00> : vector<480x1xf32>
    %2 = tpu.matmul %0, %1, %cst {dimension_numbers = #tpu.dot_dimension_numbers<[1], [0], [0], [1], [0, 0, 1, 1], [], []>} : vector<480x20xf32>, vector<20x1xf32>, vector<480x1xf32> -> vector<480x1xf32>
    %c0_3 = arith.constant 0 : index
    %c0_4 = arith.constant 0 : index
    %3 = vector.load %arg2[%c0_3, %c0_4] : memref<480x1xf32, #tpu.memory_space<vmem>>, vector<480x1xf32>
    %4 = arith.addf %2, %3 : vector<480x1xf32>
    %cst_5 = arith.constant 0.000000e+00 : f32
    %5 = vector.broadcast %cst_5 : f32 to vector<480x1xf32>
    %6 = arith.subf %5, %4 : vector<480x1xf32>
    %7 = math.exp %6 : vector<480x1xf32>
    %cst_6 = arith.constant 1.000000e+00 : f32
    %8 = vector.broadcast %cst_6 : f32 to vector<480x1xf32>
    %9 = arith.addf %8, %7 : vector<480x1xf32>
    %cst_7 = arith.constant 1.000000e+00 : f32
    %10 = vector.broadcast %cst_7 : f32 to vector<480x1xf32>
    %11 = arith.divf %10, %9 : vector<480x1xf32>
    %c0_8 = arith.constant 0 : index
    %c0_9 = arith.constant 0 : index
    %12 = vector.load %arg3[%c0_8, %c0_9] : memref<480x196xf32, #tpu.memory_space<vmem>>, vector<480x196xf32>
    %13 = vector.broadcast %11 : vector<480x1xf32> to vector<480x196xf32>
    %14 = arith.mulf %12, %13 : vector<480x196xf32>
    %c0_10 = arith.constant 0 : index
    %c0_11 = arith.constant 0 : index
    %15 = vector.load %arg4[%c0_10, %c0_11] : memref<480x196xf32, #tpu.memory_space<vmem>>, vector<480x196xf32>
    tpu.vector_store %arg4[%c0_10, %c0_11], %14 {strides = array<i32>} : memref<480x196xf32, #tpu.memory_space<vmem>>, vector<480x196xf32>,
    return
  }
}

</mosaic_0001>

<llo_original>
// kernel: se_conv_sigmoid_mul.1
$region0: #{se_conv_sigmoid_mul.1}
  #allocation0 [shape = 'u32[]', space=smem, size = 0x4, offset = 0x4, fixed_abs, tag = 'smem constant byte address 0x4 - core index']
  #allocation1 [shape = 'u32[144,128]{1,0:T(1,128)}', space=vmem, size = 0x12000, scoped, tag = 'internal scratch']
  %s0 = inlined_call_operand.vmem [shape: f32[20,1], index: 0, kind: input, shape index: {}]
  %s1 = inlined_call_operand.vmem [shape: f32[480,20], index: 1, kind: input, shape index: {}]
  %s2 = inlined_call_operand.vmem [shape: f32[480,1], index: 2, kind: input, shape index: {}]
  %s3 = inlined_call_operand.vmem [shape: f32[480,196], index: 3, kind: input, shape index: {}, may-alias: {3,4}]
  %s4 = inlined_call_operand.vmem [shape: f32[480,196], index: 4, kind: output, shape index: {}, may-alias: {3,4}]
  %s5 = sld [smem:[#allocation0]]
  $region26: #{se_conv_sigmoid_mul.1} parent=0
    _
  %s7 = ssub.s32 1, %s5
  %s8 = scalar_select 0, %s7, %s5
  // Predicated region
  $region2: #{se_conv_sigmoid_mul.1} parent=0 // pred_check
    _
  $region3: #{se_conv_sigmoid_mul.1} parent=0 // pred_check_branch
    %10 = sbr.rel (0) target = $region5
  $region4: #{se_conv_sigmoid_mul.1} parent=0 // pred_region
    _
  $region5: #{se_conv_sigmoid_mul.1} parent=0 // pred_fallthru
    _
  // Predicated region
  $region6: #{se_conv_sigmoid_mul.1} parent=0 // pred_check
    _
  $region7: #{se_conv_sigmoid_mul.1} parent=0 // pred_check_branch
    %12 = sbr.rel (0) target = $region9
  $region8: #{se_conv_sigmoid_mul.1} parent=0 // pred_region
    _
  $region9: #{se_conv_sigmoid_mul.1} parent=0 // pred_fallthru
    _
  // Predicated region
  $region10: #{se_conv_sigmoid_mul.1} parent=0 // pred_check
    _
  $region11: #{se_conv_sigmoid_mul.1} parent=0 // pred_check_branch
    %14 = sbr.rel (0) target = $region13
  $region12: #{se_conv_sigmoid_mul.1} parent=0 // pred_region
    _
  $region13: #{se_conv_sigmoid_mul.1} parent=0 // pred_fallthru
    _
  // Predicated region
  $region14: #{se_conv_sigmoid_mul.1} parent=0 // pred_check
    _
  $region15: #{se_conv_sigmoid_mul.1} parent=0 // pred_check_branch
    %16 = sbr.rel (0) target = $region17
  $region16: #{se_conv_sigmoid_mul.1} parent=0 // pred_region
    _
  $region17: #{se_conv_sigmoid_mul.1} parent=0 // pred_fallthru
    _
  %v17 = vld [vmem:[%s1] sm:$0xff]
  %v18 = vld [vmem:[%s1 + $0x8] sm:$0xff]
  %v19 = vld [vmem:[%s1 + $0x10] sm:$0xff]
  %v20 = vld [vmem:[%s1 + $0x18] sm:$0xff]
  %v21 = vld [vmem:[%s1 + $0x20] sm:$0xff]
  %v22 = vld [vmem:[%s1 + $0x28] sm:$0xff]
  %v23 = vld [vmem:[%s1 + $0x30] sm:$0xff]
  %v24 = vld [vmem:[%s1 + $0x38] sm:$0xff]
  %v25 = vld [vmem:[%s1 + $0x40] sm:$0xff]
  %v26 = vld [vmem:[%s1 + $0x48] sm:$0xff]
  %v27 = vld [vmem:[%s1 + $0x50] sm:$0xff]
  %v28 = vld [vmem:[%s1 + $0x58] sm:$0xff]
  %v29 = vld [vmem:[%s1 + $0x60] sm:$0xff]
  %v30 = vld [vmem:[%s1 + $0x68] sm:$0xff]
  %v31 = vld [vmem:[%s1 + $0x70] sm:$0xff]
  %v32 = vld [vmem:[%s1 + $0x78] sm:$0xff]
  %v33 = vld [vmem:[%s1 + $0x80] sm:$0xff]
  %v34 = vld [vmem:[%s1 + $0x88] sm:$0xff]
  %v35 = vld [vmem:[%s1 + $0x90] sm:$0xff]
  %v36 = vld [vmem:[%s1 + $0x98] sm:$0xff]
  %v37 = vld [vmem:[%s1 + $0xa0] sm:$0xff]
  %v38 = vld [vmem:[%s1 + $0xa8] sm:$0xff]
  %v39 = vld [vmem:[%s1 + $0xb0] sm:$0xff]
  %v40 = vld [vmem:[%s1 + $0xb8] sm:$0xff]
  %v41 = vld [vmem:[%s1 + $0xc0] sm:$0xff]
  %v42 = vld [vmem:[%s1 + $0xc8] sm:$0xff]
  %v43 = vld [vmem:[%s1 + $0xd0] sm:$0xff]
  %v44 = vld [vmem:[%s1 + $0xd8] sm:$0xff]
  %v45 = vld [vmem:[%s1 + $0xe0] sm:$0xff]
  %v46 = vld [vmem:[%s1 + $0xe8] sm:$0xff]
  %v47 = vld [vmem:[%s1 + $0xf0] sm:$0xff]
  %v48 = vld [vmem:[%s1 + $0xf8] sm:$0xff]
  %v49 = vld [vmem:[%s1 + $0x100] sm:$0xff]
  %v50 = vld [vmem:[%s1 + $0x108] sm:$0xff]
  %v51 = vld [vmem:[%s1 + $0x110] sm:$0xff]
  %v52 = vld [vmem:[%s1 + $0x118] sm:$0xff]
  %v53 = vld [vmem:[%s1 + $0x120] sm:$0xff]
  %v54 = vld [vmem:[%s1 + $0x128] sm:$0xff]
  %v55 = vld [vmem:[%s1 + $0x130] sm:$0xff]
  %v56 = vld [vmem:[%s1 + $0x138] sm:$0xff]
  %v57 = vld [vmem:[%s1 + $0x140] sm:$0xff]
  %v58 = vld [vmem:[%s1 + $0x148] sm:$0xff]
  %v59 = vld [vmem:[%s1 + $0x150] sm:$0xff]
  %v60 = vld [vmem:[%s1 + $0x158] sm:$0xff]
  %v61 = vld [vmem:[%s1 + $0x160] sm:$0xff]
  %v62 = vld [vmem:[%s1 + $0x168] sm:$0xff]
  %v63 = vld [vmem:[%s1 + $0x170] sm:$0xff]
  %v64 = vld [vmem:[%s1 + $0x178] sm:$0xff]
  %v65 = vld [vmem:[%s1 + $0x180] sm:$0xff]
  %v66 = vld [vmem:[%s1 + $0x188] sm:$0xff]
  %v67 = vld [vmem:[%s1 + $0x190] sm:$0xff]
  %v68 = vld [vmem:[%s1 + $0x198] sm:$0xff]
  %v69 = vld [vmem:[%s1 + $0x1a0] sm:$0xff]
  %v70 = vld [vmem:[%s1 + $0x1a8] sm:$0xff]
  %v71 = vld [vmem:[%s1 + $0x1b0] sm:$0xff]
  %v72 = vld [vmem:[%s1 + $0x1b8] sm:$0xff]
  %v73 = vld [vmem:[%s1 + $0x1c0] sm:$0xff]
  %v74 = vld [vmem:[%s1 + $0x1c8] sm:$0xff]
  %v75 = vld [vmem:[%s1 + $0x1d0] sm:$0xff]
  %v76 = vld [vmem:[%s1 + $0x1d8] sm:$0xff]
  %v77 = vld [vmem:[%s0] sm:$0xff]
  %v78 = vld [vmem:[%s0 + $0x8] sm:$0xff]
  %v79 = vld [vmem:[%s0 + $0x10] sm:$0xf]
  %v80 = vld [vmem:[%s2] sm:$0xff]
  %v81 = vld [vmem:[%s2 + $0x8] sm:$0xff]
  %v82 = vld [vmem:[%s2 + $0x10] sm:$0xff]
  %v83 = vld [vmem:[%s2 + $0x18] sm:$0xff]
  %v84 = vld [vmem:[%s2 + $0x20] sm:$0xff]
  %v85 = vld [vmem:[%s2 + $0x28] sm:$0xff]
  %v86 = vld [vmem:[%s2 + $0x30] sm:$0xff]
  %v87 = vld [vmem:[%s2 + $0x38] sm:$0xff]
  %v88 = vld [vmem:[%s2 + $0x40] sm:$0xff]
  %v89 = vld [vmem:[%s2 + $0x48] sm:$0xff]
  %v90 = vld [vmem:[%s2 + $0x50] sm:$0xff]
  %v91 = vld [vmem:[%s2 + $0x58] sm:$0xff]
  %v92 = vld [vmem:[%s2 + $0x60] sm:$0xff]
  %v93 = vld [vmem:[%s2 + $0x68] sm:$0xff]
  %v94 = vld [vmem:[%s2 + $0x70] sm:$0xff]
  %v95 = vld [vmem:[%s2 + $0x78] sm:$0xff]
  %v96 = vld [vmem:[%s2 + $0x80] sm:$0xff]
  %v97 = vld [vmem:[%s2 + $0x88] sm:$0xff]
  %v98 = vld [vmem:[%s2 + $0x90] sm:$0xff]
  %v99 = vld [vmem:[%s2 + $0x98] sm:$0xff]
  %v100 = vld [vmem:[%s2 + $0xa0] sm:$0xff]
  %v101 = vld [vmem:[%s2 + $0xa8] sm:$0xff]
  %v102 = vld [vmem:[%s2 + $0xb0] sm:$0xff]
  %v103 = vld [vmem:[%s2 + $0xb8] sm:$0xff]
  %v104 = vld [vmem:[%s2 + $0xc0] sm:$0xff]
  %v105 = vld [vmem:[%s2 + $0xc8] sm:$0xff]
  %v106 = vld [vmem:[%s2 + $0xd0] sm:$0xff]
  %v107 = vld [vmem:[%s2 + $0xd8] sm:$0xff]
  %v108 = vld [vmem:[%s2 + $0xe0] sm:$0xff]
  %v109 = vld [vmem:[%s2 + $0xe8] sm:$0xff]
  %v110 = vld [vmem:[%s2 + $0xf0] sm:$0xff]
  %v111 = vld [vmem:[%s2 + $0xf8] sm:$0xff]
  %v112 = vld [vmem:[%s2 + $0x100] sm:$0xff]
  %v113 = vld [vmem:[%s2 + $0x108] sm:$0xff]
  %v114 = vld [vmem:[%s2 + $0x110] sm:$0xff]
  %v115 = vld [vmem:[%s2 + $0x118] sm:$0xff]
  %v116 = vld [vmem:[%s2 + $0x120] sm:$0xff]
  %v117 = vld [vmem:[%s2 + $0x128] sm:$0xff]
  %v118 = vld [vmem:[%s2 + $0x130] sm:$0xff]
  %v119 = vld [vmem:[%s2 + $0x138] sm:$0xff]
  %v120 = vld [vmem:[%s2 + $0x140] sm:$0xff]
  %v121 = vld [vmem:[%s2 + $0x148] sm:$0xff]
  %v122 = vld [vmem:[%s2 + $0x150] sm:$0xff]
  %v123 = vld [vmem:[%s2 + $0x158] sm:$0xff]
  %v124 = vld [vmem:[%s2 + $0x160] sm:$0xff]
  %v125 = vld [vmem:[%s2 + $0x168] sm:$0xff]
  %v126 = vld [vmem:[%s2 + $0x170] sm:$0xff]
  %v127 = vld [vmem:[%s2 + $0x178] sm:$0xff]
  %v128 = vld [vmem:[%s2 + $0x180] sm:$0xff]
  %v129 = vld [vmem:[%s2 + $0x188] sm:$0xff]
  %v130 = vld [vmem:[%s2 + $0x190] sm:$0xff]
  %v131 = vld [vmem:[%s2 + $0x198] sm:$0xff]
  %v132 = vld [vmem:[%s2 + $0x1a0] sm:$0xff]
  %v133 = vld [vmem:[%s2 + $0x1a8] sm:$0xff]
  %v134 = vld [vmem:[%s2 + $0x1b0] sm:$0xff]
  %v135 = vld [vmem:[%s2 + $0x1b8] sm:$0xff]
  %v136 = vld [vmem:[%s2 + $0x1c0] sm:$0xff]
  %v137 = vld [vmem:[%s2 + $0x1c8] sm:$0xff]
  %v138 = vld [vmem:[%s2 + $0x1d0] sm:$0xff]
  %v139 = vld [vmem:[%s2 + $0x1d8] sm:$0xff]
  %vm140 = vcmask 162816
  %v142 = vsel %vm140, %v17, 0
  %v145 = vsel %vm140, %v18, 0
  %v148 = vsel %vm140, %v19, 0
  %v151 = vsel %vm140, %v20, 0
  %v154 = vsel %vm140, %v21, 0
  %v157 = vsel %vm140, %v22, 0
  %v160 = vsel %vm140, %v23, 0
  %v163 = vsel %vm140, %v24, 0
  %v166 = vsel %vm140, %v25, 0
  %v169 = vsel %vm140, %v26, 0
  %v172 = vsel %vm140, %v27, 0
  %v175 = vsel %vm140, %v28, 0
  %v178 = vsel %vm140, %v29, 0
  %v181 = vsel %vm140, %v30, 0
  %v184 = vsel %vm140, %v31, 0
  %v187 = vsel %vm140, %v32, 0
  %v190 = vsel %vm140, %v33, 0
  %v193 = vsel %vm140, %v34, 0
  %v196 = vsel %vm140, %v35, 0
  %v199 = vsel %vm140, %v36, 0
  %v202 = vsel %vm140, %v37, 0
  %v205 = vsel %vm140, %v38, 0
  %v208 = vsel %vm140, %v39, 0
  %v211 = vsel %vm140, %v40, 0
  %v214 = vsel %vm140, %v41, 0
  %v217 = vsel %vm140, %v42, 0
  %v220 = vsel %vm140, %v43, 0
  %v223 = vsel %vm140, %v44, 0
  %v226 = vsel %vm140, %v45, 0
  %v229 = vsel %vm140, %v46, 0
  %v232 = vsel %vm140, %v47, 0
  %v235 = vsel %vm140, %v48, 0
  %v238 = vsel %vm140, %v49, 0
  %v241 = vsel %vm140, %v50, 0
  %v244 = vsel %vm140, %v51, 0
  %v247 = vsel %vm140, %v52, 0
  %v250 = vsel %vm140, %v53, 0
  %v253 = vsel %vm140, %v54, 0
  %v256 = vsel %vm140, %v55, 0
  %v259 = vsel %vm140, %v56, 0
  %v262 = vsel %vm140, %v57, 0
  %v265 = vsel %vm140, %v58, 0
  %v268 = vsel %vm140, %v59, 0
  %v271 = vsel %vm140, %v60, 0
  %v274 = vsel %vm140, %v61, 0
  %v277 = vsel %vm140, %v62, 0
  %v280 = vsel %vm140, %v63, 0
  %v283 = vsel %vm140, %v64, 0
  %v286 = vsel %vm140, %v65, 0
  %v289 = vsel %vm140, %v66, 0
  %v292 = vsel %vm140, %v67, 0
  %v295 = vsel %vm140, %v68, 0
  %v298 = vsel %vm140, %v69, 0
  %v301 = vsel %vm140, %v70, 0
  %v304 = vsel %vm140, %v71, 0
  %v307 = vsel %vm140, %v72, 0
  %v310 = vsel %vm140, %v73, 0
  %v313 = vsel %vm140, %v74, 0
  %v316 = vsel %vm140, %v75, 0
  %v319 = vsel %vm140, %v76, 0
  %vm321 = vcmask 1043456
  %v323 = vsel %vm321, %v79, 0
  %325 = vmatprep.subr.mxu0 0.0
  %326 = vmatpush1.msra.mxu0 %v77
  %327 = vmatprep.subr.mxu0 0.0
  %328 = vmatpush1.msra.mxu0 %v78
  %329 = vmatprep.subr.mxu0 0.0
  %330 = vmatpush1.msra.mxu0 %v323
  %331 = vmatprep.subr.mxu0 0.0
  %332 = vmatpush1.msra.mxu0 0.0
  %333 = vmatprep.subr.mxu0 0.0
  %334 = vmatpush1.msra.mxu0 0.0
  %335 = vmatprep.subr.mxu0 0.0
  %336 = vmatpush1.msra.mxu0 0.0
  %337 = vmatprep.subr.mxu0 0.0
  %338 = vmatpush1.msra.mxu0 0.0
  %339 = vmatprep.subr.mxu0 0.0
  %340 = vmatpush1.msra.mxu0 0.0
  %341 = vmatprep.subr.mxu0 0.0
  %342 = vmatpush1.msra.mxu0 0.0
  %343 = vmatprep.subr.mxu0 0.0
  %344 = vmatpush1.msra.mxu0 0.0
  %345 = vmatprep.subr.mxu0 0.0
  %346 = vmatpush1.msra.mxu0 0.0
  %347 = vmatprep.subr.mxu0 0.0
  %348 = vmatpush1.msra.mxu0 0.0
  %349 = vmatprep.subr.mxu0 0.0
  %350 = vmatpush1.msra.mxu0 0.0
  %351 = vmatprep.subr.mxu0 0.0
  %352 = vmatpush1.msra.mxu0 0.0
  %353 = vmatprep.subr.mxu0 0.0
  %354 = vmatpush1.msra.mxu0 0.0
  %355 = vmatprep.subr.mxu0 0.0
  %356 = vmatpush1.msra.mxu0 0.0
  %357 = vmatprep.subr.mxu0 0.0
  %358 = vmatpush1.msra.mxu0 0.0
  %359 = vmatprep.subr.mxu0 0.0
  %360 = vmatpush1.msra.mxu0 0.0
  %361 = vmatprep.subr.mxu0 0.0
  %362 = vmatpush1.msra.mxu0 0.0
  %363 = vmatprep.subr.mxu0 0.0
  %364 = vmatpush1.msra.mxu0 0.0
  %365 = vmatprep.subr.mxu0 0.0
  %366 = vmatpush1.msra.mxu0 0.0
  %367 = vmatprep.subr.mxu0 0.0
  %368 = vmatpush1.msra.mxu0 0.0
  %369 = vmatprep.subr.mxu0 0.0
  %370 = vmatpush1.msra.mxu0 0.0
  %371 = vmatprep.subr.mxu0 0.0
  %372 = vmatpush1.msra.mxu0 0.0
  %373 = vmatprep.subr.mxu0 0.0
  %374 = vmatpush1.msra.mxu0 0.0
  %375 = vmatprep.subr.mxu0 0.0
  %376 = vmatpush1.msra.mxu0 0.0
  %377 = vmatprep.subr.mxu0 0.0
  %378 = vmatpush1.msra.mxu0 0.0
  %379 = vmatprep.subr.mxu0 0.0
  %380 = vmatpush1.msra.mxu0 0.0
  %381 = vmatprep.subr.mxu0 0.0
  %382 = vmatpush1.msra.mxu0 0.0
  %383 = vmatprep.subr.mxu0 0.0
  %384 = vmatpush1.msra.mxu0 0.0
  %385 = vmatprep.subr.mxu0 0.0
  %386 = vmatpush1.msra.mxu0 0.0
  %387 = vmatprep.subr.mxu0 0.0
  %388 = vmatpush1.msra.mxu0 0.0
  %389 = vmatprep.mubr.f32.mxu0 0.0
  %390 = vmatmul.mubr.f32.gmra.mrb[0].mxu0 %v142
  %v391 = vpop.f32.mrb[0].mxu0
  %v392 = vadd.f32 %v80, %v391
  %v393 = vpop.f32.mrb[0].mxu0
  %394 = vmatprep.mubr.f32.mxu0 0.0
  %395 = vmatmul.mubr.f32.gmra.mrb[0].mxu0 %v145
  %v396 = vpop.f32.mrb[0].mxu0
  %v397 = vadd.f32 %v81, %v396
  %v398 = vpop.f32.mrb[0].mxu0
  %399 = vmatprep.mubr.f32.mxu0 0.0
  %400 = vmatmul.mubr.f32.gmra.mrb[0].mxu0 %v148
  %v401 = vpop.f32.mrb[0].mxu0
  %v402 = vadd.f32 %v82, %v401
  %v403 = vpop.f32.mrb[0].mxu0
  %404 = vmatprep.mubr.f32.mxu0 0.0
  %405 = vmatmul.mubr.f32.gmra.mrb[0].mxu0 %v151
  %v406 = vpop.f32.mrb[0].mxu0
  %v407 = vadd.f32 %v83, %v406
  %v408 = vpop.f32.mrb[0].mxu0
  %409 = vmatprep.mubr.f32.mxu0 0.0
  %410 = vmatmul.mubr.f32.gmra.mrb[0].mxu0 %v154
  %v411 = vpop.f32.mrb[0].mxu0
  %v412 = vadd.f32 %v84, %v411
  %v413 = vpop.f32.mrb[0].mxu0
  %414 = vmatprep.mubr.f32.mxu0 0.0
  %415 = vmatmul.mubr.f32.gmra.mrb[0].mxu0 %v157
  %v416 = vpop.f32.mrb[0].mxu0
  %v417 = vadd.f32 %v85, %v416
  %v418 = vpop.f32.mrb[0].mxu0
  %419 = vmatprep.mubr.f32.mxu0 0.0
  %420 = vmatmul.mubr.f32.gmra.mrb[0].mxu0 %v160
  %v421 = vpop.f32.mrb[0].mxu0
  %v422 = vadd.f32 %v86, %v421
  %v423 = vpop.f32.mrb[0].mxu0
  %424 = vmatprep.mubr.f32.mxu0 0.0
  %425 = vmatmul.mubr.f32.gmra.mrb[0].mxu0 %v163
  %v426 = vpop.f32.mrb[0].mxu0
  %v427 = vadd.f32 %v87, %v426
  %v428 = vpop.f32.mrb[0].mxu0
  %429 = vmatprep.mubr.f32.mxu0 0.0
  %430 = vmatmul.mubr.f32.gmra.mrb[0].mxu0 %v166
  %v431 = vpop.f32.mrb[0].mxu0
  %v432 = vadd.f32 %v88, %v431
  %v433 = vpop.f32.mrb[0].mxu0
  %434 = vmatprep.mubr.f32.mxu0 0.0
  %435 = vmatmul.mubr.f32.gmra.mrb[0].mxu0 %v169
  %v436 = vpop.f32.mrb[0].mxu0
  %v437 = vadd.f32 %v89, %v436
  %v438 = vpop.f32.mrb[0].mxu0
  %439 = vmatprep.mubr.f32.mxu0 0.0
  %440 = vmatmul.mubr.f32.gmra.mrb[0].mxu0 %v172
  %v441 = vpop.f32.mrb[0].mxu0
  %v442 = vadd.f32 %v90, %v441
  %v443 = vpop.f32.mrb[0].mxu0
  %444 = vmatprep.mubr.f32.mxu0 0.0
  %445 = vmatmul.mubr.f32.gmra.mrb[0].mxu0 %v175
  %v446 = vpop.f32.mrb[0].mxu0
  %v447 = vadd.f32 %v91, %v446
  %v448 = vpop.f32.mrb[0].mxu0
  %449 = vmatprep.mubr.f32.mxu0 0.0
  %450 = vmatmul.mubr.f32.gmra.mrb[0].mxu0 %v178
  %v451 = vpop.f32.mrb[0].mxu0
  %v452 = vadd.f32 %v92, %v451
  %v453 = vpop.f32.mrb[0].mxu0
  %454 = vmatprep.mubr.f32.mxu0 0.0
  %455 = vmatmul.mubr.f32.gmra.mrb[0].mxu0 %v181
  %v456 = vpop.f32.mrb[0].mxu0
  %v457 = vadd.f32 %v93, %v456
  %v458 = vpop.f32.mrb[0].mxu0
  %459 = vmatprep.mubr.f32.mxu0 0.0
  %460 = vmatmul.mubr.f32.gmra.mrb[0].mxu0 %v184
  %v461 = vpop.f32.mrb[0].mxu0
  %v462 = vadd.f32 %v94, %v461
  %v463 = vpop.f32.mrb[0].mxu0
  %464 = vmatprep.mubr.f32.mxu0 0.0
  %465 = vmatmul.mubr.f32.gmra.mrb[0].mxu0 %v187
  %v466 = vpop.f32.mrb[0].mxu0
  %v467 = vadd.f32 %v95, %v466
  %v468 = vpop.f32.mrb[0].mxu0
  %469 = vmatprep.mubr.f32.mxu0 0.0
  %470 = vmatmul.mubr.f32.gmra.mrb[0].mxu0 %v190
  %v471 = vpop.f32.mrb[0].mxu0
  %v472 = vadd.f32 %v96, %v471
  %v473 = vpop.f32.mrb[0].mxu0
  %474 = vmatprep.mubr.f32.mxu0 0.0
  %475 = vmatmul.mubr.f32.gmra.mrb[0].mxu0 %v193
  %v476 = vpop.f32.mrb[0].mxu0
  %v477 = vadd.f32 %v97, %v476
  %v478 = vpop.f32.mrb[0].mxu0
  %479 = vmatprep.mubr.f32.mxu0 0.0
  %480 = vmatmul.mubr.f32.gmra.mrb[0].mxu0 %v196
  %v481 = vpop.f32.mrb[0].mxu0
  %v482 = vadd.f32 %v98, %v481
  %v483 = vpop.f32.mrb[0].mxu0
  %484 = vmatprep.mubr.f32.mxu0 0.0
  %485 = vmatmul.mubr.f32.gmra.mrb[0].mxu0 %v199
  %v486 = vpop.f32.mrb[0].mxu0
  %v487 = vadd.f32 %v99, %v486
  %v488 = vpop.f32.mrb[0].mxu0
  %489 = vmatprep.mubr.f32.mxu0 0.0
  %490 = vmatmul.mubr.f32.gmra.mrb[0].mxu0 %v202
  %v491 = vpop.f32.mrb[0].mxu0
  %v492 = vadd.f32 %v100, %v491
  %v493 = vpop.f32.mrb[0].mxu0
  %494 = vmatprep.mubr.f32.mxu0 0.0
  %495 = vmatmul.mubr.f32.gmra.mrb[0].mxu0 %v205
  %v496 = vpop.f32.mrb[0].mxu0
  %v497 = vadd.f32 %v101, %v496
  %v498 = vpop.f32.mrb[0].mxu0
  %499 = vmatprep.mubr.f32.mxu0 0.0
  %500 = vmatmul.mubr.f32.gmra.mrb[0].mxu0 %v208
  %v501 = vpop.f32.mrb[0].mxu0
  %v502 = vadd.f32 %v102, %v501
  %v503 = vpop.f32.mrb[0].mxu0
  %504 = vmatprep.mubr.f32.mxu0 0.0
  %505 = vmatmul.mubr.f32.gmra.mrb[0].mxu0 %v211
  %v506 = vpop.f32.mrb[0].mxu0
  %v507 = vadd.f32 %v103, %v506
  %v508 = vpop.f32.mrb[0].mxu0
  %509 = vmatprep.mubr.f32.mxu0 0.0
  %510 = vmatmul.mubr.f32.gmra.mrb[0].mxu0 %v214
  %v511 = vpop.f32.mrb[0].mxu0
  %v512 = vadd.f32 %v104, %v511
  %v513 = vpop.f32.mrb[0].mxu0
  %514 = vmatprep.mubr.f32.mxu0 0.0
  %515 = vmatmul.mubr.f32.gmra.mrb[0].mxu0 %v217
  %v516 = vpop.f32.mrb[0].mxu0
  %v517 = vadd.f32 %v105, %v516
  %v518 = vpop.f32.mrb[0].mxu0
  %519 = vmatprep.mubr.f32.mxu0 0.0
  %520 = vmatmul.mubr.f32.gmra.mrb[0].mxu0 %v220
  %v521 = vpop.f32.mrb[0].mxu0
  %v522 = vadd.f32 %v106, %v521
  %v523 = vpop.f32.mrb[0].mxu0
  %524 = vmatprep.mubr.f32.mxu0 0.0
  %525 = vmatmul.mubr.f32.gmra.mrb[0].mxu0 %v223
  %v526 = vpop.f32.mrb[0].mxu0
  %v527 = vadd.f32 %v107, %v526
  %v528 = vpop.f32.mrb[0].mxu0
  %529 = vmatprep.mubr.f32.mxu0 0.0
  %530 = vmatmul.mubr.f32.gmra.mrb[0].mxu0 %v226
  %v531 = vpop.f32.mrb[0].mxu0
  %v532 = vadd.f32 %v108, %v531
  %v533 = vpop.f32.mrb[0].mxu0
  %534 = vmatprep.mubr.f32.mxu0 0.0
  %535 = vmatmul.mubr.f32.gmra.mrb[0].mxu0 %v229
  %v536 = vpop.f32.mrb[0].mxu0
  %v537 = vadd.f32 %v109, %v536
  %v538 = vpop.f32.mrb[0].mxu0
  %539 = vmatprep.mubr.f32.mxu0 0.0
  %540 = vmatmul.mubr.f32.gmra.mrb[0].mxu0 %v232
  %v541 = vpop.f32.mrb[0].mxu0
  %v542 = vadd.f32 %v110, %v541
  %v543 = vpop.f32.mrb[0].mxu0
  %544 = vmatprep.mubr.f32.mxu0 0.0
  %545 = vmatmul.mubr.f32.gmra.mrb[0].mxu0 %v235
  %v546 = vpop.f32.mrb[0].mxu0
  %v547 = vadd.f32 %v111, %v546
  %v548 = vpop.f32.mrb[0].mxu0
  %549 = vmatprep.mubr.f32.mxu0 0.0
  %550 = vmatmul.mubr.f32.gmra.mrb[0].mxu0 %v238
  %v551 = vpop.f32.mrb[0].mxu0
  %v552 = vadd.f32 %v112, %v551
  %v553 = vpop.f32.mrb[0].mxu0
  %554 = vmatprep.mubr.f32.mxu0 0.0
  %555 = vmatmul.mubr.f32.gmra.mrb[0].mxu0 %v241
  %v556 = vpop.f32.mrb[0].mxu0
  %v557 = vadd.f32 %v113, %v556
  %v558 = vpop.f32.mrb[0].mxu0
  %559 = vmatprep.mubr.f32.mxu0 0.0
  %560 = vmatmul.mubr.f32.gmra.mrb[0].mxu0 %v244
  %v561 = vpop.f32.mrb[0].mxu0
  %v562 = vadd.f32 %v114, %v561
  %v563 = vpop.f32.mrb[0].mxu0
  %564 = vmatprep.mubr.f32.mxu0 0.0
  %565 = vmatmul.mubr.f32.gmra.mrb[0].mxu0 %v247
  %v566 = vpop.f32.mrb[0].mxu0
  %v567 = vadd.f32 %v115, %v566
  %v568 = vpop.f32.mrb[0].mxu0
  %569 = vmatprep.mubr.f32.mxu0 0.0
  %570 = vmatmul.mubr.f32.gmra.mrb[0].mxu0 %v250
  %v571 = vpop.f32.mrb[0].mxu0
  %v572 = vadd.f32 %v116, %v571
  %v573 = vpop.f32.mrb[0].mxu0
  %574 = vmatprep.mubr.f32.mxu0 0.0
  %575 = vmatmul.mubr.f32.gmra.mrb[0].mxu0 %v253
  %v576 = vpop.f32.mrb[0].mxu0
  %v577 = vadd.f32 %v117, %v576
  %v578 = vpop.f32.mrb[0].mxu0
  %579 = vmatprep.mubr.f32.mxu0 0.0
  %580 = vmatmul.mubr.f32.gmra.mrb[0].mxu0 %v256
  %v581 = vpop.f32.mrb[0].mxu0
  %v582 = vadd.f32 %v118, %v581
  %v583 = vpop.f32.mrb[0].mxu0
  %584 = vmatprep.mubr.f32.mxu0 0.0
  %585 = vmatmul.mubr.f32.gmra.mrb[0].mxu0 %v259
  %v586 = vpop.f32.mrb[0].mxu0
  %v587 = vadd.f32 %v119, %v586
  %v588 = vpop.f32.mrb[0].mxu0
  %589 = vmatprep.mubr.f32.mxu0 0.0
  %590 = vmatmul.mubr.f32.gmra.mrb[0].mxu0 %v262
  %v591 = vpop.f32.mrb[0].mxu0
  %v592 = vadd.f32 %v120, %v591
  %v593 = vpop.f32.mrb[0].mxu0
  %594 = vmatprep.mubr.f32.mxu0 0.0
  %595 = vmatmul.mubr.f32.gmra.mrb[0].mxu0 %v265
  %v596 = vpop.f32.mrb[0].mxu0
  %v597 = vadd.f32 %v121, %v596
  %v598 = vpop.f32.mrb[0].mxu0
  %599 = vmatprep.mubr.f32.mxu0 0.0
  %600 = vmatmul.mubr.f32.gmra.mrb[0].mxu0 %v268
  %v601 = vpop.f32.mrb[0].mxu0
  %v602 = vadd.f32 %v122, %v601
  %v603 = vpop.f32.mrb[0].mxu0
  %604 = vmatprep.mubr.f32.mxu0 0.0
  %605 = vmatmul.mubr.f32.gmra.mrb[0].mxu0 %v271
  %v606 = vpop.f32.mrb[0].mxu0
  %v607 = vadd.f32 %v123, %v606
  %v608 = vpop.f32.mrb[0].mxu0
  %609 = vmatprep.mubr.f32.mxu0 0.0
  %610 = vmatmul.mubr.f32.gmra.mrb[0].mxu0 %v274
  %v611 = vpop.f32.mrb[0].mxu0
  %v612 = vadd.f32 %v124, %v611
  %v613 = vpop.f32.mrb[0].mxu0
  %614 = vmatprep.mubr.f32.mxu0 0.0
  %615 = vmatmul.mubr.f32.gmra.mrb[0].mxu0 %v277
  %v616 = vpop.f32.mrb[0].mxu0
  %v617 = vadd.f32 %v125, %v616
  %v618 = vpop.f32.mrb[0].mxu0
  %619 = vmatprep.mubr.f32.mxu0 0.0
  %620 = vmatmul.mubr.f32.gmra.mrb[0].mxu0 %v280
  %v621 = vpop.f32.mrb[0].mxu0
  %v622 = vadd.f32 %v126, %v621
  %v623 = vpop.f32.mrb[0].mxu0
  %624 = vmatprep.mubr.f32.mxu0 0.0
  %625 = vmatmul.mubr.f32.gmra.mrb[0].mxu0 %v283
  %v626 = vpop.f32.mrb[0].mxu0
  %v627 = vadd.f32 %v127, %v626
  %v628 = vpop.f32.mrb[0].mxu0
  %629 = vmatprep.mubr.f32.mxu0 0.0
  %630 = vmatmul.mubr.f32.gmra.mrb[0].mxu0 %v286
  %v631 = vpop.f32.mrb[0].mxu0
  %v632 = vadd.f32 %v128, %v631
  %v633 = vpop.f32.mrb[0].mxu0
  %634 = vmatprep.mubr.f32.mxu0 0.0
  %635 = vmatmul.mubr.f32.gmra.mrb[0].mxu0 %v289
  %v636 = vpop.f32.mrb[0].mxu0
  %v637 = vadd.f32 %v129, %v636
  %v638 = vpop.f32.mrb[0].mxu0
  %639 = vmatprep.mubr.f32.mxu0 0.0
  %640 = vmatmul.mubr.f32.gmra.mrb[0].mxu0 %v292
  %v641 = vpop.f32.mrb[0].mxu0
  %v642 = vadd.f32 %v130, %v641
  %v643 = vpop.f32.mrb[0].mxu0
  %644 = vmatprep.mubr.f32.mxu0 0.0
  %645 = vmatmul.mubr.f32.gmra.mrb[0].mxu0 %v295
  %v646 = vpop.f32.mrb[0].mxu0
  %v647 = vadd.f32 %v131, %v646
  %v648 = vpop.f32.mrb[0].mxu0
  %649 = vmatprep.mubr.f32.mxu0 0.0
  %650 = vmatmul.mubr.f32.gmra.mrb[0].mxu0 %v298
  %v651 = vpop.f32.mrb[0].mxu0
  %v652 = vadd.f32 %v132, %v651
  %v653 = vpop.f32.mrb[0].mxu0
  %654 = vmatprep.mubr.f32.mxu0 0.0
  %655 = vmatmul.mubr.f32.gmra.mrb[0].mxu0 %v301
  %v656 = vpop.f32.mrb[0].mxu0
  %v657 = vadd.f32 %v133, %v656
  %v658 = vpop.f32.mrb[0].mxu0
  %659 = vmatprep.mubr.f32.mxu0 0.0
  %660 = vmatmul.mubr.f32.gmra.mrb[0].mxu0 %v304
  %v661 = vpop.f32.mrb[0].mxu0
  %v662 = vadd.f32 %v134, %v661
  %v663 = vpop.f32.mrb[0].mxu0
  %664 = vmatprep.mubr.f32.mxu0 0.0
  %665 = vmatmul.mubr.f32.gmra.mrb[0].mxu0 %v307
  %v666 = vpop.f32.mrb[0].mxu0
  %v667 = vadd.f32 %v135, %v666
  %v668 = vpop.f32.mrb[0].mxu0
  %669 = vmatprep.mubr.f32.mxu0 0.0
  %670 = vmatmul.mubr.f32.gmra.mrb[0].mxu0 %v310
  %v671 = vpop.f32.mrb[0].mxu0
  %v672 = vadd.f32 %v136, %v671
  %v673 = vpop.f32.mrb[0].mxu0
  %674 = vmatprep.mubr.f32.mxu0 0.0
  %675 = vmatmul.mubr.f32.gmra.mrb[0].mxu0 %v313
  %v676 = vpop.f32.mrb[0].mxu0
  %v677 = vadd.f32 %v137, %v676
  %v678 = vpop.f32.mrb[0].mxu0
  %679 = vmatprep.mubr.f32.mxu0 0.0
  %680 = vmatmul.mubr.f32.gmra.mrb[0].mxu0 %v316
  %v681 = vpop.f32.mrb[0].mxu0
  %v682 = vadd.f32 %v138, %v681
  %v683 = vpop.f32.mrb[0].mxu0
  %684 = vmatprep.mubr.f32.mxu0 0.0
  %685 = vmatmul.mubr.f32.gmra.mrb[0].mxu0 %v319
  %v686 = vpop.f32.mrb[0].mxu0
  %v687 = vadd.f32 %v139, %v686
  %v688 = vpop.f32.mrb[0].mxu0
  %689 = vdwg.mxu0
  %v690 = vsub.f32 0.0, %v392
  %v691 = vsub.f32 0.0, %v397
  %v692 = vsub.f32 0.0, %v402
  %v693 = vsub.f32 0.0, %v407
  %v694 = vsub.f32 0.0, %v412
  %v695 = vsub.f32 0.0, %v417
  %v696 = vsub.f32 0.0, %v422
  %v697 = vsub.f32 0.0, %v427
  %v698 = vsub.f32 0.0, %v432
  %v699 = vsub.f32 0.0, %v437
  %v700 = vsub.f32 0.0, %v442
  %v701 = vsub.f32 0.0, %v447
  %v702 = vsub.f32 0.0, %v452
  %v703 = vsub.f32 0.0, %v457
  %v704 = vsub.f32 0.0, %v462
  %v705 = vsub.f32 0.0, %v467
  %v706 = vsub.f32 0.0, %v472
  %v707 = vsub.f32 0.0, %v477
  %v708 = vsub.f32 0.0, %v482
  %v709 = vsub.f32 0.0, %v487
  %v710 = vsub.f32 0.0, %v492
  %v711 = vsub.f32 0.0, %v497
  %v712 = vsub.f32 0.0, %v502
  %v713 = vsub.f32 0.0, %v507
  %v714 = vsub.f32 0.0, %v512
  %v715 = vsub.f32 0.0, %v517
  %v716 = vsub.f32 0.0, %v522
  %v717 = vsub.f32 0.0, %v527
  %v718 = vsub.f32 0.0, %v532
  %v719 = vsub.f32 0.0, %v537
  %v720 = vsub.f32 0.0, %v542
  %v721 = vsub.f32 0.0, %v547
  %v722 = vsub.f32 0.0, %v552
  %v723 = vsub.f32 0.0, %v557
  %v724 = vsub.f32 0.0, %v562
  %v725 = vsub.f32 0.0, %v567
  %v726 = vsub.f32 0.0, %v572
  %v727 = vsub.f32 0.0, %v577
  %v728 = vsub.f32 0.0, %v582
  %v729 = vsub.f32 0.0, %v587
  %v730 = vsub.f32 0.0, %v592
  %v731 = vsub.f32 0.0, %v597
  %v732 = vsub.f32 0.0, %v602
  %v733 = vsub.f32 0.0, %v607
  %v734 = vsub.f32 0.0, %v612
  %v735 = vsub.f32 0.0, %v617
  %v736 = vsub.f32 0.0, %v622
  %v737 = vsub.f32 0.0, %v627
  %v738 = vsub.f32 0.0, %v632
  %v739 = vsub.f32 0.0, %v637
  %v740 = vsub.f32 0.0, %v642
  %v741 = vsub.f32 0.0, %v647
  %v742 = vsub.f32 0.0, %v652
  %v743 = vsub.f32 0.0, %v657
  %v744 = vsub.f32 0.0, %v662
  %v745 = vsub.f32 0.0, %v667
  %v746 = vsub.f32 0.0, %v672
  %v747 = vsub.f32 0.0, %v677
  %v748 = vsub.f32 0.0, %v682
  %v749 = vsub.f32 0.0, %v687
  %v750 = vmul.f32 %v690, 1.442695
  %v751 = vpow.pop %v750
  %v752 = vmul.f32 %v691, 1.442695
  %v753 = vpow.pop %v752
  %v754 = vmul.f32 %v692, 1.442695
  %v755 = vpow.pop %v754
  %v756 = vmul.f32 %v693, 1.442695
  %v757 = vpow.pop %v756
  %v758 = vmul.f32 %v694, 1.442695
  %v759 = vpow.pop %v758
  %v760 = vmul.f32 %v695, 1.442695
  %v761 = vpow.pop %v760
  %v762 = vmul.f32 %v696, 1.442695
  %v763 = vpow.pop %v762
  %v764 = vmul.f32 %v697, 1.442695
  %v765 = vpow.pop %v764
  %v766 = vmul.f32 %v698, 1.442695
  %v767 = vpow.pop %v766
  %v768 = vmul.f32 %v699, 1.442695
  %v769 = vpow.pop %v768
  %v770 = vmul.f32 %v700, 1.442695
  %v771 = vpow.pop %v770
  %v772 = vmul.f32 %v701, 1.442695
  %v773 = vpow.pop %v772
  %v774 = vmul.f32 %v702, 1.442695
  %v775 = vpow.pop %v774
  %v776 = vmul.f32 %v703, 1.442695
  %v777 = vpow.pop %v776
  %v778 = vmul.f32 %v704, 1.442695
  %v779 = vpow.pop %v778
  %v780 = vmul.f32 %v705, 1.442695
  %v781 = vpow.pop %v780
  %v782 = vmul.f32 %v706, 1.442695
  %v783 = vpow.pop %v782
  %v784 = vmul.f32 %v707, 1.442695
  %v785 = vpow.pop %v784
  %v786 = vmul.f32 %v708, 1.442695
  %v787 = vpow.pop %v786
  %v788 = vmul.f32 %v709, 1.442695
  %v789 = vpow.pop %v788
  %v790 = vmul.f32 %v710, 1.442695
  %v791 = vpow.pop %v790
  %v792 = vmul.f32 %v711, 1.442695
  %v793 = vpow.pop %v792
  %v794 = vmul.f32 %v712, 1.442695
  %v795 = vpow.pop %v794
  %v796 = vmul.f32 %v713, 1.442695
  %v797 = vpow.pop %v796
  %v798 = vmul.f32 %v714, 1.442695
  %v799 = vpow.pop %v798
  %v800 = vmul.f32 %v715, 1.442695
  %v801 = vpow.pop %v800
  %v802 = vmul.f32 %v716, 1.442695
  %v803 = vpow.pop %v802
  %v804 = vmul.f32 %v717, 1.442695
  %v805 = vpow.pop %v804
  %v806 = vmul.f32 %v718, 1.442695
  %v807 = vpow.pop %v806
  %v808 = vmul.f32 %v719, 1.442695
  %v809 = vpow.pop %v808
  %v810 = vmul.f32 %v720, 1.442695
  %v811 = vpow.pop %v810
  %v812 = vmul.f32 %v721, 1.442695
  %v813 = vpow.pop %v812
  %v814 = vmul.f32 %v722, 1.442695
  %v815 = vpow.pop %v814
  %v816 = vmul.f32 %v723, 1.442695
  %v817 = vpow.pop %v816
  %v818 = vmul.f32 %v724, 1.442695
  %v819 = vpow.pop %v818
  %v820 = vmul.f32 %v725, 1.442695
  %v821 = vpow.pop %v820
  %v822 = vmul.f32 %v726, 1.442695
  %v823 = vpow.pop %v822
  %v824 = vmul.f32 %v727, 1.442695
  %v825 = vpow.pop %v824
  %v826 = vmul.f32 %v728, 1.442695
  %v827 = vpow.pop %v826
  %v828 = vmul.f32 %v729, 1.442695
  %v829 = vpow.pop %v828
  %v830 = vmul.f32 %v730, 1.442695
  %v831 = vpow.pop %v830
  %v832 = vmul.f32 %v731, 1.442695
  %v833 = vpow.pop %v832
  %v834 = vmul.f32 %v732, 1.442695
  %v835 = vpow.pop %v834
  %v836 = vmul.f32 %v733, 1.442695
  %v837 = vpow.pop %v836
  %v838 = vmul.f32 %v734, 1.442695
  %v839 = vpow.pop %v838
  %v840 = vmul.f32 %v735, 1.442695
  %v841 = vpow.pop %v840
  %v842 = vmul.f32 %v736, 1.442695
  %v843 = vpow.pop %v842
  %v844 = vmul.f32 %v737, 1.442695
  %v845 = vpow.pop %v844
  %v846 = vmul.f32 %v738, 1.442695
  %v847 = vpow.pop %v846
  %v848 = vmul.f32 %v739, 1.442695
  %v849 = vpow.pop %v848
  %v850 = vmul.f32 %v740, 1.442695
  %v851 = vpow.pop %v850
  %v852 = vmul.f32 %v741, 1.442695
  %v853 = vpow.pop %v852
  %v854 = vmul.f32 %v742, 1.442695
  %v855 = vpow.pop %v854
  %v856 = vmul.f32 %v743, 1.442695
  %v857 = vpow.pop %v856
  %v858 = vmul.f32 %v744, 1.442695
  %v859 = vpow.pop %v858
  %v860 = vmul.f32 %v745, 1.442695
  %v861 = vpow.pop %v860
  %v862 = vmul.f32 %v746, 1.442695
  %v863 = vpow.pop %v862
  %v864 = vmul.f32 %v747, 1.442695
  %v865 = vpow.pop %v864
  %v866 = vmul.f32 %v748, 1.442695
  %v867 = vpow.pop %v866
  %v868 = vmul.f32 %v749, 1.442695
  %v869 = vpow.pop %v868
  %v870 = vadd.f32 %v751, 1.0
  %v871 = vadd.f32 %v753, 1.0
  %v872 = vadd.f32 %v755, 1.0
  %v873 = vadd.f32 %v757, 1.0
  %v874 = vadd.f32 %v759, 1.0
  %v875 = vadd.f32 %v761, 1.0
  %v876 = vadd.f32 %v763, 1.0
  %v877 = vadd.f32 %v765, 1.0
  %v878 = vadd.f32 %v767, 1.0
  %v879 = vadd.f32 %v769, 1.0
  %v880 = vadd.f32 %v771, 1.0
  %v881 = vadd.f32 %v773, 1.0
  %v882 = vadd.f32 %v775, 1.0
  %v883 = vadd.f32 %v777, 1.0
  %v884 = vadd.f32 %v779, 1.0
  %v885 = vadd.f32 %v781, 1.0
  %v886 = vadd.f32 %v783, 1.0
  %v887 = vadd.f32 %v785, 1.0
  %v888 = vadd.f32 %v787, 1.0
  %v889 = vadd.f32 %v789, 1.0
  %v890 = vadd.f32 %v791, 1.0
  %v891 = vadd.f32 %v793, 1.0
  %v892 = vadd.f32 %v795, 1.0
  %v893 = vadd.f32 %v797, 1.0
  %v894 = vadd.f32 %v799, 1.0
  %v895 = vadd.f32 %v801, 1.0
  %v896 = vadd.f32 %v803, 1.0
  %v897 = vadd.f32 %v805, 1.0
  %v898 = vadd.f32 %v807, 1.0
  %v899 = vadd.f32 %v809, 1.0
  %v900 = vadd.f32 %v811, 1.0
  %v901 = vadd.f32 %v813, 1.0
  %v902 = vadd.f32 %v815, 1.0
  %v903 = vadd.f32 %v817, 1.0
  %v904 = vadd.f32 %v819, 1.0
  %v905 = vadd.f32 %v821, 1.0
  %v906 = vadd.f32 %v823, 1.0
  %v907 = vadd.f32 %v825, 1.0
  %v908 = vadd.f32 %v827, 1.0
  %v909 = vadd.f32 %v829, 1.0
  %v910 = vadd.f32 %v831, 1.0
  %v911 = vadd.f32 %v833, 1.0
  %v912 = vadd.f32 %v835, 1.0
  %v913 = vadd.f32 %v837, 1.0
  %v914 = vadd.f32 %v839, 1.0
  %v915 = vadd.f32 %v841, 1.0
  %v916 = vadd.f32 %v843, 1.0
  %v917 = vadd.f32 %v845, 1.0
  %v918 = vadd.f32 %v847, 1.0
  %v919 = vadd.f32 %v849, 1.0
  %v920 = vadd.f32 %v851, 1.0
  %v921 = vadd.f32 %v853, 1.0
  %v922 = vadd.f32 %v855, 1.0
  %v923 = vadd.f32 %v857, 1.0
  %v924 = vadd.f32 %v859, 1.0
  %v925 = vadd.f32 %v861, 1.0
  %v926 = vadd.f32 %v863, 1.0
  %v927 = vadd.f32 %v865, 1.0
  %v928 = vadd.f32 %v867, 1.0
  %v929 = vadd.f32 %v869, 1.0
  %v930 = vrcp.pop %v870
  %v931 = vmul.f32 1.0, %v930
  %v932 = vrcp.pop %v871
  %v933 = vmul.f32 1.0, %v932
  %v934 = vrcp.pop %v872
  %v935 = vmul.f32 1.0, %v934
  %v936 = vrcp.pop %v873
  %v937 = vmul.f32 1.0, %v936
  %v938 = vrcp.pop %v874
  %v939 = vmul.f32 1.0, %v938
  %v940 = vrcp.pop %v875
  %v941 = vmul.f32 1.0, %v940
  %v942 = vrcp.pop %v876
  %v943 = vmul.f32 1.0, %v942
  %v944 = vrcp.pop %v877
  %v945 = vmul.f32 1.0, %v944
  %v946 = vrcp.pop %v878
  %v947 = vmul.f32 1.0, %v946
  %v948 = vrcp.pop %v879
  %v949 = vmul.f32 1.0, %v948
  %v950 = vrcp.pop %v880
  %v951 = vmul.f32 1.0, %v950
  %v952 = vrcp.pop %v881
  %v953 = vmul.f32 1.0, %v952
  %v954 = vrcp.pop %v882
  %v955 = vmul.f32 1.0, %v954
  %v956 = vrcp.pop %v883
  %v957 = vmul.f32 1.0, %v956
  %v958 = vrcp.pop %v884
  %v959 = vmul.f32 1.0, %v958
  %v960 = vrcp.pop %v885
  %v961 = vmul.f32 1.0, %v960
  %v962 = vrcp.pop %v886
  %v963 = vmul.f32 1.0, %v962
  %v964 = vrcp.pop %v887
  %v965 = vmul.f32 1.0, %v964
  %v966 = vrcp.pop %v888
  %v967 = vmul.f32 1.0, %v966
  %v968 = vrcp.pop %v889
  %v969 = vmul.f32 1.0, %v968
  %v970 = vrcp.pop %v890
  %v971 = vmul.f32 1.0, %v970
  %v972 = vrcp.pop %v891
  %v973 = vmul.f32 1.0, %v972
  %v974 = vrcp.pop %v892
  %v975 = vmul.f32 1.0, %v974
  %v976 = vrcp.pop %v893
  %v977 = vmul.f32 1.0, %v976
  %v978 = vrcp.pop %v894
  %v979 = vmul.f32 1.0, %v978
  %v980 = vrcp.pop %v895
  %v981 = vmul.f32 1.0, %v980
  %v982 = vrcp.pop %v896
  %v983 = vmul.f32 1.0, %v982
  %v984 = vrcp.pop %v897
  %v985 = vmul.f32 1.0, %v984
  %v986 = vrcp.pop %v898
  %v987 = vmul.f32 1.0, %v986
  %v988 = vrcp.pop %v899
  %v989 = vmul.f32 1.0, %v988
  %v990 = vrcp.pop %v900
  %v991 = vmul.f32 1.0, %v990
  %v992 = vrcp.pop %v901
  %v993 = vmul.f32 1.0, %v992
  %v994 = vrcp.pop %v902
  %v995 = vmul.f32 1.0, %v994
  %v996 = vrcp.pop %v903
  %v997 = vmul.f32 1.0, %v996
  %v998 = vrcp.pop %v904
  %v999 = vmul.f32 1.0, %v998
  %v1000 = vrcp.pop %v905
  %v1001 = vmul.f32 1.0, %v1000
  %v1002 = vrcp.pop %v906
  %v1003 = vmul.f32 1.0, %v1002
  %v1004 = vrcp.pop %v907
  %v1005 = vmul.f32 1.0, %v1004
  %v1006 = vrcp.pop %v908
  %v1007 = vmul.f32 1.0, %v1006
  %v1008 = vrcp.pop %v909
  %v1009 = vmul.f32 1.0, %v1008
  %v1010 = vrcp.pop %v910
  %v1011 = vmul.f32 1.0, %v1010
  %v1012 = vrcp.pop %v911
  %v1013 = vmul.f32 1.0, %v1012
  %v1014 = vrcp.pop %v912
  %v1015 = vmul.f32 1.0, %v1014
  %v1016 = vrcp.pop %v913
  %v1017 = vmul.f32 1.0, %v1016
  %v1018 = vrcp.pop %v914
  %v1019 = vmul.f32 1.0, %v1018
  %v1020 = vrcp.pop %v915
  %v1021 = vmul.f32 1.0, %v1020
  %v1022 = vrcp.pop %v916
  %v1023 = vmul.f32 1.0, %v1022
  %v1024 = vrcp.pop %v917
  %v1025 = vmul.f32 1.0, %v1024
  %v1026 = vrcp.pop %v918
  %v1027 = vmul.f32 1.0, %v1026
  %v1028 = vrcp.pop %v919
  %v1029 = vmul.f32 1.0, %v1028
  %v1030 = vrcp.pop %v920
  %v1031 = vmul.f32 1.0, %v1030
  %v1032 = vrcp.pop %v921
  %v1033 = vmul.f32 1.0, %v1032
  %v1034 = vrcp.pop %v922
  %v1035 = vmul.f32 1.0, %v1034
  %v1036 = vrcp.pop %v923
  %v1037 = vmul.f32 1.0, %v1036
  %v1038 = vrcp.pop %v924
  %v1039 = vmul.f32 1.0, %v1038
  %v1040 = vrcp.pop %v925
  %v1041 = vmul.f32 1.0, %v1040
  %v1042 = vrcp.pop %v926
  %v1043 = vmul.f32 1.0, %v1042
  %v1044 = vrcp.pop %v927
  %v1045 = vmul.f32 1.0, %v1044
  %v1046 = vrcp.pop %v928
  %v1047 = vmul.f32 1.0, %v1046
  %v1048 = vrcp.pop %v929
  %v1049 = vmul.f32 1.0, %v1048
  %v1050 = vld [vmem:[%s3] sm:$0xff]
  %v1051 = vld [vmem:[%s3 + $0x8] sm:$0xff]
  %v1052 = vld [vmem:[%s3 + $0x10] sm:$0xff]
  %v1053 = vld [vmem:[%s3 + $0x18] sm:$0xff]
  %v1054 = vld [vmem:[%s3 + $0x20] sm:$0xff]
  %v1055 = vld [vmem:[%s3 + $0x28] sm:$0xff]
  %v1056 = vld [vmem:[%s3 + $0x30] sm:$0xff]
  %v1057 = vld [vmem:[%s3 + $0x38] sm:$0xff]
  %v1058 = vld [vmem:[%s3 + $0x40] sm:$0xff]
  %v1059 = vld [vmem:[%s3 + $0x48] sm:$0xff]
  %v1060 = vld [vmem:[%s3 + $0x50] sm:$0xff]
  %v1061 = vld [vmem:[%s3 + $0x58] sm:$0xff]
  %v1062 = vld [vmem:[%s3 + $0x60] sm:$0xff]
  %v1063 = vld [vmem:[%s3 + $0x68] sm:$0xff]
  %v1064 = vld [vmem:[%s3 + $0x70] sm:$0xff]
  %v1065 = vld [vmem:[%s3 + $0x78] sm:$0xff]
  %v1066 = vld [vmem:[%s3 + $0x80] sm:$0xff]
  %v1067 = vld [vmem:[%s3 + $0x88] sm:$0xff]
  %v1068 = vld [vmem:[%s3 + $0x90] sm:$0xff]
  %v1069 = vld [vmem:[%s3 + $0x98] sm:$0xff]
  %v1070 = vld [vmem:[%s3 + $0xa0] sm:$0xff]
  %v1071 = vld [vmem:[%s3 + $0xa8] sm:$0xff]
  %v1072 = vld [vmem:[%s3 + $0xb0] sm:$0xff]
  %v1073 = vld [vmem:[%s3 + $0xb8] sm:$0xff]
  %v1074 = vld [vmem:[%s3 + $0xc0] sm:$0xff]
  %v1075 = vld [vmem:[%s3 + $0xc8] sm:$0xff]
  %v1076 = vld [vmem:[%s3 + $0xd0] sm:$0xff]
  %v1077 = vld [vmem:[%s3 + $0xd8] sm:$0xff]
  %v1078 = vld [vmem:[%s3 + $0xe0] sm:$0xff]
  %v1079 = vld [vmem:[%s3 + $0xe8] sm:$0xff]
  %v1080 = vld [vmem:[%s3 + $0xf0] sm:$0xff]
  %v1081 = vld [vmem:[%s3 + $0xf8] sm:$0xff]
  %v1082 = vld [vmem:[%s3 + $0x100] sm:$0xff]
  %v1083 = vld [vmem:[%s3 + $0x108] sm:$0xff]
  %v1084 = vld [vmem:[%s3 + $0x110] sm:$0xff]
  %v1085 = vld [vmem:[%s3 + $0x118] sm:$0xff]
  %v1086 = vld [vmem:[%s3 + $0x120] sm:$0xff]
  %v1087 = vld [vmem:[%s3 + $0x128] sm:$0xff]
  %v1088 = vld [vmem:[%s3 + $0x130] sm:$0xff]
  %v1089 = vld [vmem:[%s3 + $0x138] sm:$0xff]
  %v1090 = vld [vmem:[%s3 + $0x140] sm:$0xff]
  %v1091 = vld [vmem:[%s3 + $0x148] sm:$0xff]
  %v1092 = vld [vmem:[%s3 + $0x150] sm:$0xff]
  %v1093 = vld [vmem:[%s3 + $0x158] sm:$0xff]
  %v1094 = vld [vmem:[%s3 + $0x160] sm:$0xff]
  %v1095 = vld [vmem:[%s3 + $0x168] sm:$0xff]
  %v1096 = vld [vmem:[%s3 + $0x170] sm:$0xff]
  %v1097 = vld [vmem:[%s3 + $0x178] sm:$0xff]
  %v1098 = vld [vmem:[%s3 + $0x180] sm:$0xff]
  %v1099 = vld [vmem:[%s3 + $0x188] sm:$0xff]
  %v1100 = vld [vmem:[%s3 + $0x190] sm:$0xff]
  %v1101 = vld [vmem:[%s3 + $0x198] sm:$0xff]
  %v1102 = vld [vmem:[%s3 + $0x1a0] sm:$0xff]
  %v1103 = vld [vmem:[%s3 + $0x1a8] sm:$0xff]
  %v1104 = vld [vmem:[%s3 + $0x1b0] sm:$0xff]
  %v1105 = vld [vmem:[%s3 + $0x1b8] sm:$0xff]
  %v1106 = vld [vmem:[%s3 + $0x1c0] sm:$0xff]
  %v1107 = vld [vmem:[%s3 + $0x1c8] sm:$0xff]
  %v1108 = vld [vmem:[%s3 + $0x1d0] sm:$0xff]
  %v1109 = vld [vmem:[%s3 + $0x1d8] sm:$0xff]
  %v1110 = vld [vmem:[%s3 + $0x1e0] sm:$0xff]
  %v1111 = vld [vmem:[%s3 + $0x1e8] sm:$0xff]
  %v1112 = vld [vmem:[%s3 + $0x1f0] sm:$0xff]
  %v1113 = vld [vmem:[%s3 + $0x1f8] sm:$0xff]
  %v1114 = vld [vmem:[%s3 + $0x200] sm:$0xff]
  %v1115 = vld [vmem:[%s3 + $0x208] sm:$0xff]
  %v1116 = vld [vmem:[%s3 + $0x210] sm:$0xff]
  %v1117 = vld [vmem:[%s3 + $0x218] sm:$0xff]
  %v1118 = vld [vmem:[%s3 + $0x220] sm:$0xff]
  %v1119 = vld [vmem:[%s3 + $0x228] sm:$0xff]
  %v1120 = vld [vmem:[%s3 + $0x230] sm:$0xff]
  %v1121 = vld [vmem:[%s3 + $0x238] sm:$0xff]
  %v1122 = vld [vmem:[%s3 + $0x240] sm:$0xff]
  %v1123 = vld [vmem:[%s3 + $0x248] sm:$0xff]
  %v1124 = vld [vmem:[%s3 + $0x250] sm:$0xff]
  %v1125 = vld [vmem:[%s3 + $0x258] sm:$0xff]
  %v1126 = vld [vmem:[%s3 + $0x260] sm:$0xff]
  %v1127 = vld [vmem:[%s3 + $0x268] sm:$0xff]
  %v1128 = vld [vmem:[%s3 + $0x270] sm:$0xff]
  %v1129 = vld [vmem:[%s3 + $0x278] sm:$0xff]
  %v1130 = vld [vmem:[%s3 + $0x280] sm:$0xff]
  %v1131 = vld [vmem:[%s3 + $0x288] sm:$0xff]
  %v1132 = vld [vmem:[%s3 + $0x290] sm:$0xff]
  %v1133 = vld [vmem:[%s3 + $0x298] sm:$0xff]
  %v1134 = vld [vmem:[%s3 + $0x2a0] sm:$0xff]
  %v1135 = vld [vmem:[%s3 + $0x2a8] sm:$0xff]
  %v1136 = vld [vmem:[%s3 + $0x2b0] sm:$0xff]
  %v1137 = vld [vmem:[%s3 + $0x2b8] sm:$0xff]
  %v1138 = vld [vmem:[%s3 + $0x2c0] sm:$0xff]
  %v1139 = vld [vmem:[%s3 + $0x2c8] sm:$0xff]
  %v1140 = vld [vmem:[%s3 + $0x2d0] sm:$0xff]
  %v1141 = vld [vmem:[%s3 + $0x2d8] sm:$0xff]
  %v1142 = vld [vmem:[%s3 + $0x2e0] sm:$0xff]
  %v1143 = vld [vmem:[%s3 + $0x2e8] sm:$0xff]
  %v1144 = vld [vmem:[%s3 + $0x2f0] sm:$0xff]
  %v1145 = vld [vmem:[%s3 + $0x2f8] sm:$0xff]
  %v1146 = vld [vmem:[%s3 + $0x300] sm:$0xff]
  %v1147 = vld [vmem:[%s3 + $0x308] sm:$0xff]
  %v1148 = vld [vmem:[%s3 + $0x310] sm:$0xff]
  %v1149 = vld [vmem:[%s3 + $0x318] sm:$0xff]
  %v1150 = vld [vmem:[%s3 + $0x320] sm:$0xff]
  %v1151 = vld [vmem:[%s3 + $0x328] sm:$0xff]
  %v1152 = vld [vmem:[%s3 + $0x330] sm:$0xff]
  %v1153 = vld [vmem:[%s3 + $0x338] sm:$0xff]
  %v1154 = vld [vmem:[%s3 + $0x340] sm:$0xff]
  %v1155 = vld [vmem:[%s3 + $0x348] sm:$0xff]
  %v1156 = vld [vmem:[%s3 + $0x350] sm:$0xff]
  %v1157 = vld [vmem:[%s3 + $0x358] sm:$0xff]
  %v1158 = vld [vmem:[%s3 + $0x360] sm:$0xff]
  %v1159 = vld [vmem:[%s3 + $0x368] sm:$0xff]
  %v1160 = vld [vmem:[%s3 + $0x370] sm:$0xff]
  %v1161 = vld [vmem:[%s3 + $0x378] sm:$0xff]
  %v1162 = vld [vmem:[%s3 + $0x380] sm:$0xff]
  %v1163 = vld [vmem:[%s3 + $0x388] sm:$0xff]
  %v1164 = vld [vmem:[%s3 + $0x390] sm:$0xff]
  %v1165 = vld [vmem:[%s3 + $0x398] sm:$0xff]
  %v1166 = vld [vmem:[%s3 + $0x3a0] sm:$0xff]
  %v1167 = vld [vmem:[%s3 + $0x3a8] sm:$0xff]
  %v1168 = vld [vmem:[%s3 + $0x3b0] sm:$0xff]
  %v1169 = vld [vmem:[%s3 + $0x3b8] sm:$0xff]
  %1171 = vset.pattern.permute.xlu0 0
  %1172 = vperm.xlu0 %1171, %v931
  %v1173 = vpop.permute.xlu0 %1172
  %1176 = vset.pattern.permute.xlu0 0
  %1177 = vperm.xlu0 %1176, %v933
  %v1178 = vpop.permute.xlu0 %1177
  %1181 = vset.pattern.permute.xlu0 0
  %1182 = vperm.xlu0 %1181, %v935
  %v1183 = vpop.permute.xlu0 %1182
  %1186 = vset.pattern.permute.xlu0 0
  %1187 = vperm.xlu0 %1186, %v937
  %v1188 = vpop.permute.xlu0 %1187
  %1191 = vset.pattern.permute.xlu0 0
  %1192 = vperm.xlu0 %1191, %v939
  %v1193 = vpop.permute.xlu0 %1192
  %1196 = vset.pattern.permute.xlu0 0
  %1197 = vperm.xlu0 %1196, %v941
  %v1198 = vpop.permute.xlu0 %1197
  %1201 = vset.pattern.permute.xlu0 0
  %1202 = vperm.xlu0 %1201, %v943
  %v1203 = vpop.permute.xlu0 %1202
  %1206 = vset.pattern.permute.xlu0 0
  %1207 = vperm.xlu0 %1206, %v945
  %v1208 = vpop.permute.xlu0 %1207
  %1211 = vset.pattern.permute.xlu0 0
  %1212 = vperm.xlu0 %1211, %v947
  %v1213 = vpop.permute.xlu0 %1212
  %1216 = vset.pattern.permute.xlu0 0
  %1217 = vperm.xlu0 %1216, %v949
  %v1218 = vpop.permute.xlu0 %1217
  %1221 = vset.pattern.permute.xlu0 0
  %1222 = vperm.xlu0 %1221, %v951
  %v1223 = vpop.permute.xlu0 %1222
  %1226 = vset.pattern.permute.xlu0 0
  %1227 = vperm.xlu0 %1226, %v953
  %v1228 = vpop.permute.xlu0 %1227
  %1231 = vset.pattern.permute.xlu0 0
  %1232 = vperm.xlu0 %1231, %v955
  %v1233 = vpop.permute.xlu0 %1232
  %1236 = vset.pattern.permute.xlu0 0
  %1237 = vperm.xlu0 %1236, %v957
  %v1238 = vpop.permute.xlu0 %1237
  %1241 = vset.pattern.permute.xlu0 0
  %1242 = vperm.xlu0 %1241, %v959
  %v1243 = vpop.permute.xlu0 %1242
  %1246 = vset.pattern.permute.xlu0 0
  %1247 = vperm.xlu0 %1246, %v961
  %v1248 = vpop.permute.xlu0 %1247
  %1251 = vset.pattern.permute.xlu0 0
  %1252 = vperm.xlu0 %1251, %v963
  %v1253 = vpop.permute.xlu0 %1252
  %1256 = vset.pattern.permute.xlu0 0
  %1257 = vperm.xlu0 %1256, %v965
  %v1258 = vpop.permute.xlu0 %1257
  %1261 = vset.pattern.permute.xlu0 0
  %1262 = vperm.xlu0 %1261, %v967
  %v1263 = vpop.permute.xlu0 %1262
  %1266 = vset.pattern.permute.xlu0 0
  %1267 = vperm.xlu0 %1266, %v969
  %v1268 = vpop.permute.xlu0 %1267
  %1271 = vset.pattern.permute.xlu0 0
  %1272 = vperm.xlu0 %1271, %v971
  %v1273 = vpop.permute.xlu0 %1272
  %1276 = vset.pattern.permute.xlu0 0
  %1277 = vperm.xlu0 %1276, %v973
  %v1278 = vpop.permute.xlu0 %1277
  %1281 = vset.pattern.permute.xlu0 0
  %1282 = vperm.xlu0 %1281, %v975
  %v1283 = vpop.permute.xlu0 %1282
  %1286 = vset.pattern.permute.xlu0 0
  %1287 = vperm.xlu0 %1286, %v977
  %v1288 = vpop.permute.xlu0 %1287
  %1291 = vset.pattern.permute.xlu0 0
  %1292 = vperm.xlu0 %1291, %v979
  %v1293 = vpop.permute.xlu0 %1292
  %1296 = vset.pattern.permute.xlu0 0
  %1297 = vperm.xlu0 %1296, %v981
  %v1298 = vpop.permute.xlu0 %1297
  %1301 = vset.pattern.permute.xlu0 0
  %1302 = vperm.xlu0 %1301, %v983
  %v1303 = vpop.permute.xlu0 %1302
  %1306 = vset.pattern.permute.xlu0 0
  %1307 = vperm.xlu0 %1306, %v985
  %v1308 = vpop.permute.xlu0 %1307
  %1311 = vset.pattern.permute.xlu0 0
  %1312 = vperm.xlu0 %1311, %v987
  %v1313 = vpop.permute.xlu0 %1312
  %1316 = vset.pattern.permute.xlu0 0
  %1317 = vperm.xlu0 %1316, %v989
  %v1318 = vpop.permute.xlu0 %1317
  %1321 = vset.pattern.permute.xlu0 0
  %1322 = vperm.xlu0 %1321, %v991
  %v1323 = vpop.permute.xlu0 %1322
  %1326 = vset.pattern.permute.xlu0 0
  %1327 = vperm.xlu0 %1326, %v993
  %v1328 = vpop.permute.xlu0 %1327
  %1331 = vset.pattern.permute.xlu0 0
  %1332 = vperm.xlu0 %1331, %v995
  %v1333 = vpop.permute.xlu0 %1332
  %1336 = vset.pattern.permute.xlu0 0
  %1337 = vperm.xlu0 %1336, %v997
  %v1338 = vpop.permute.xlu0 %1337
  %1341 = vset.pattern.permute.xlu0 0
  %1342 = vperm.xlu0 %1341, %v999
  %v1343 = vpop.permute.xlu0 %1342
  %1346 = vset.pattern.permute.xlu0 0
  %1347 = vperm.xlu0 %1346, %v1001
  %v1348 = vpop.permute.xlu0 %1347
  %1351 = vset.pattern.permute.xlu0 0
  %1352 = vperm.xlu0 %1351, %v1003
  %v1353 = vpop.permute.xlu0 %1352
  %1356 = vset.pattern.permute.xlu0 0
  %1357 = vperm.xlu0 %1356, %v1005
  %v1358 = vpop.permute.xlu0 %1357
  %1361 = vset.pattern.permute.xlu0 0
  %1362 = vperm.xlu0 %1361, %v1007
  %v1363 = vpop.permute.xlu0 %1362
  %1366 = vset.pattern.permute.xlu0 0
  %1367 = vperm.xlu0 %1366, %v1009
  %v1368 = vpop.permute.xlu0 %1367
  %1371 = vset.pattern.permute.xlu0 0
  %1372 = vperm.xlu0 %1371, %v1011
  %v1373 = vpop.permute.xlu0 %1372
  %1376 = vset.pattern.permute.xlu0 0
  %1377 = vperm.xlu0 %1376, %v1013
  %v1378 = vpop.permute.xlu0 %1377
  %1381 = vset.pattern.permute.xlu0 0
  %1382 = vperm.xlu0 %1381, %v1015
  %v1383 = vpop.permute.xlu0 %1382
  %1386 = vset.pattern.permute.xlu0 0
  %1387 = vperm.xlu0 %1386, %v1017
  %v1388 = vpop.permute.xlu0 %1387
  %1391 = vset.pattern.permute.xlu0 0
  %1392 = vperm.xlu0 %1391, %v1019
  %v1393 = vpop.permute.xlu0 %1392
  %1396 = vset.pattern.permute.xlu0 0
  %1397 = vperm.xlu0 %1396, %v1021
  %v1398 = vpop.permute.xlu0 %1397
  %1401 = vset.pattern.permute.xlu0 0
  %1402 = vperm.xlu0 %1401, %v1023
  %v1403 = vpop.permute.xlu0 %1402
  %1406 = vset.pattern.permute.xlu0 0
  %1407 = vperm.xlu0 %1406, %v1025
  %v1408 = vpop.permute.xlu0 %1407
  %1411 = vset.pattern.permute.xlu0 0
  %1412 = vperm.xlu0 %1411, %v1027
  %v1413 = vpop.permute.xlu0 %1412
  %1416 = vset.pattern.permute.xlu0 0
  %1417 = vperm.xlu0 %1416, %v1029
  %v1418 = vpop.permute.xlu0 %1417
  %1421 = vset.pattern.permute.xlu0 0
  %1422 = vperm.xlu0 %1421, %v1031
  %v1423 = vpop.permute.xlu0 %1422
  %1426 = vset.pattern.permute.xlu0 0
  %1427 = vperm.xlu0 %1426, %v1033
  %v1428 = vpop.permute.xlu0 %1427
  %1431 = vset.pattern.permute.xlu0 0
  %1432 = vperm.xlu0 %1431, %v1035
  %v1433 = vpop.permute.xlu0 %1432
  %1436 = vset.pattern.permute.xlu0 0
  %1437 = vperm.xlu0 %1436, %v1037
  %v1438 = vpop.permute.xlu0 %1437
  %1441 = vset.pattern.permute.xlu0 0
  %1442 = vperm.xlu0 %1441, %v1039
  %v1443 = vpop.permute.xlu0 %1442
  %1446 = vset.pattern.permute.xlu0 0
  %1447 = vperm.xlu0 %1446, %v1041
  %v1448 = vpop.permute.xlu0 %1447
  %1451 = vset.pattern.permute.xlu0 0
  %1452 = vperm.xlu0 %1451, %v1043
  %v1453 = vpop.permute.xlu0 %1452
  %1456 = vset.pattern.permute.xlu0 0
  %1457 = vperm.xlu0 %1456, %v1045
  %v1458 = vpop.permute.xlu0 %1457
  %1461 = vset.pattern.permute.xlu0 0
  %1462 = vperm.xlu0 %1461, %v1047
  %v1463 = vpop.permute.xlu0 %1462
  %1466 = vset.pattern.permute.xlu0 0
  %1467 = vperm.xlu0 %1466, %v1049
  %v1468 = vpop.permute.xlu0 %1467
  %v1470 = vmul.f32 %v1050, %v1173
  %v1471 = vmul.f32 %v1051, %v1173
  %v1472 = vmul.f32 %v1052, %v1178
  %v1473 = vmul.f32 %v1053, %v1178
  %v1474 = vmul.f32 %v1054, %v1183
  %v1475 = vmul.f32 %v1055, %v1183
  %v1476 = vmul.f32 %v1056, %v1188
  %v1477 = vmul.f32 %v1057, %v1188
  %v1478 = vmul.f32 %v1058, %v1193
  %v1479 = vmul.f32 %v1059, %v1193
  %v1480 = vmul.f32 %v1060, %v1198
  %v1481 = vmul.f32 %v1061, %v1198
  %v1482 = vmul.f32 %v1062, %v1203
  %v1483 = vmul.f32 %v1063, %v1203
  %v1484 = vmul.f32 %v1064, %v1208
  %v1485 = vmul.f32 %v1065, %v1208
  %v1486 = vmul.f32 %v1066, %v1213
  %v1487 = vmul.f32 %v1067, %v1213
  %v1488 = vmul.f32 %v1068, %v1218
  %v1489 = vmul.f32 %v1069, %v1218
  %v1490 = vmul.f32 %v1070, %v1223
  %v1491 = vmul.f32 %v1071, %v1223
  %v1492 = vmul.f32 %v1072, %v1228
  %v1493 = vmul.f32 %v1073, %v1228
  %v1494 = vmul.f32 %v1074, %v1233
  %v1495 = vmul.f32 %v1075, %v1233
  %v1496 = vmul.f32 %v1076, %v1238
  %v1497 = vmul.f32 %v1077, %v1238
  %v1498 = vmul.f32 %v1078, %v1243
  %v1499 = vmul.f32 %v1079, %v1243
  %v1500 = vmul.f32 %v1080, %v1248
  %v1501 = vmul.f32 %v1081, %v1248
  %v1502 = vmul.f32 %v1082, %v1253
  %v1503 = vmul.f32 %v1083, %v1253
  %v1504 = vmul.f32 %v1084, %v1258
  %v1505 = vmul.f32 %v1085, %v1258
  %v1506 = vmul.f32 %v1086, %v1263
  %v1507 = vmul.f32 %v1087, %v1263
  %v1508 = vmul.f32 %v1088, %v1268
  %v1509 = vmul.f32 %v1089, %v1268
  %v1510 = vmul.f32 %v1090, %v1273
  %v1511 = vmul.f32 %v1091, %v1273
  %v1512 = vmul.f32 %v1092, %v1278
  %v1513 = vmul.f32 %v1093, %v1278
  %v1514 = vmul.f32 %v1094, %v1283
  %v1515 = vmul.f32 %v1095, %v1283
  %v1516 = vmul.f32 %v1096, %v1288
  %v1517 = vmul.f32 %v1097, %v1288
  %v1518 = vmul.f32 %v1098, %v1293
  %v1519 = vmul.f32 %v1099, %v1293
  %v1520 = vmul.f32 %v1100, %v1298
  %v1521 = vmul.f32 %v1101, %v1298
  %v1522 = vmul.f32 %v1102, %v1303
  %v1523 = vmul.f32 %v1103, %v1303
  %v1524 = vmul.f32 %v1104, %v1308
  %v1525 = vmul.f32 %v1105, %v1308
  %v1526 = vmul.f32 %v1106, %v1313
  %v1527 = vmul.f32 %v1107, %v1313
  %v1528 = vmul.f32 %v1108, %v1318
  %v1529 = vmul.f32 %v1109, %v1318
  %v1530 = vmul.f32 %v1110, %v1323
  %v1531 = vmul.f32 %v1111, %v1323
  %v1532 = vmul.f32 %v1112, %v1328
  %v1533 = vmul.f32 %v1113, %v1328
  %v1534 = vmul.f32 %v1114, %v1333
  %v1535 = vmul.f32 %v1115, %v1333
  %v1536 = vmul.f32 %v1116, %v1338
  %v1537 = vmul.f32 %v1117, %v1338
  %v1538 = vmul.f32 %v1118, %v1343
  %v1539 = vmul.f32 %v1119, %v1343
  %v1540 = vmul.f32 %v1120, %v1348
  %v1541 = vmul.f32 %v1121, %v1348
  %v1542 = vmul.f32 %v1122, %v1353
  %v1543 = vmul.f32 %v1123, %v1353
  %v1544 = vmul.f32 %v1124, %v1358
  %v1545 = vmul.f32 %v1125, %v1358
  %v1546 = vmul.f32 %v1126, %v1363
  %v1547 = vmul.f32 %v1127, %v1363
  %v1548 = vmul.f32 %v1128, %v1368
  %v1549 = vmul.f32 %v1129, %v1368
  %v1550 = vmul.f32 %v1130, %v1373
  %v1551 = vmul.f32 %v1131, %v1373
  %v1552 = vmul.f32 %v1132, %v1378
  %v1553 = vmul.f32 %v1133, %v1378
  %v1554 = vmul.f32 %v1134, %v1383
  %v1555 = vmul.f32 %v1135, %v1383
  %v1556 = vmul.f32 %v1136, %v1388
  %v1557 = vmul.f32 %v1137, %v1388
  %v1558 = vmul.f32 %v1138, %v1393
  %v1559 = vmul.f32 %v1139, %v1393
  %v1560 = vmul.f32 %v1140, %v1398
  %v1561 = vmul.f32 %v1141, %v1398
  %v1562 = vmul.f32 %v1142, %v1403
  %v1563 = vmul.f32 %v1143, %v1403
  %v1564 = vmul.f32 %v1144, %v1408
  %v1565 = vmul.f32 %v1145, %v1408
  %v1566 = vmul.f32 %v1146, %v1413
  %v1567 = vmul.f32 %v1147, %v1413
  %v1568 = vmul.f32 %v1148, %v1418
  %v1569 = vmul.f32 %v1149, %v1418
  %v1570 = vmul.f32 %v1150, %v1423
  %v1571 = vmul.f32 %v1151, %v1423
  %v1572 = vmul.f32 %v1152, %v1428
  %v1573 = vmul.f32 %v1153, %v1428
  %v1574 = vmul.f32 %v1154, %v1433
  %v1575 = vmul.f32 %v1155, %v1433
  %v1576 = vmul.f32 %v1156, %v1438
  %v1577 = vmul.f32 %v1157, %v1438
  %v1578 = vmul.f32 %v1158, %v1443
  %v1579 = vmul.f32 %v1159, %v1443
  %v1580 = vmul.f32 %v1160, %v1448
  %v1581 = vmul.f32 %v1161, %v1448
  %v1582 = vmul.f32 %v1162, %v1453
  %v1583 = vmul.f32 %v1163, %v1453
  %v1584 = vmul.f32 %v1164, %v1458
  %v1585 = vmul.f32 %v1165, %v1458
  %v1586 = vmul.f32 %v1166, %v1463
  %v1587 = vmul.f32 %v1167, %v1463
  %v1588 = vmul.f32 %v1168, %v1468
  %v1589 = vmul.f32 %v1169, %v1468
  %1590 = vst [vmem:[%s4] sm:$0xff] %v1470
  %vm1591 = vcmask 556032
  %1592 = vst.msk [vmem:[%s4 + $0x8] sm:$0xff] %vm1591, %v1471
  %1593 = vst [vmem:[%s4 + $0x10] sm:$0xff] %v1472
  %1594 = vst.msk [vmem:[%s4 + $0x18] sm:$0xff] %vm1591, %v1473
  %1595 = vst [vmem:[%s4 + $0x20] sm:$0xff] %v1474
  %1596 = vst.msk [vmem:[%s4 + $0x28] sm:$0xff] %vm1591, %v1475
  %1597 = vst [vmem:[%s4 + $0x30] sm:$0xff] %v1476
  %1598 = vst.msk [vmem:[%s4 + $0x38] sm:$0xff] %vm1591, %v1477
  %1599 = vst [vmem:[%s4 + $0x40] sm:$0xff] %v1478
  %1600 = vst.msk [vmem:[%s4 + $0x48] sm:$0xff] %vm1591, %v1479
  %1601 = vst [vmem:[%s4 + $0x50] sm:$0xff] %v1480
  %1602 = vst.msk [vmem:[%s4 + $0x58] sm:$0xff] %vm1591, %v1481
  %1603 = vst [vmem:[%s4 + $0x60] sm:$0xff] %v1482
  %1604 = vst.msk [vmem:[%s4 + $0x68] sm:$0xff] %vm1591, %v1483
  %1605 = vst [vmem:[%s4 + $0x70] sm:$0xff] %v1484
  %1606 = vst.msk [vmem:[%s4 + $0x78] sm:$0xff] %vm1591, %v1485
  %1607 = vst [vmem:[%s4 + $0x80] sm:$0xff] %v1486
  %1608 = vst.msk [vmem:[%s4 + $0x88] sm:$0xff] %vm1591, %v1487
  %1609 = vst [vmem:[%s4 + $0x90] sm:$0xff] %v1488
  %1610 = vst.msk [vmem:[%s4 + $0x98] sm:$0xff] %vm1591, %v1489
  %1611 = vst [vmem:[%s4 + $0xa0] sm:$0xff] %v1490
  %1612 = vst.msk [vmem:[%s4 + $0xa8] sm:$0xff] %vm1591, %v1491
  %1613 = vst [vmem:[%s4 + $0xb0] sm:$0xff] %v1492
  %1614 = vst.msk [vmem:[%s4 + $0xb8] sm:$0xff] %vm1591, %v1493
  %1615 = vst [vmem:[%s4 + $0xc0] sm:$0xff] %v1494
  %1616 = vst.msk [vmem:[%s4 + $0xc8] sm:$0xff] %vm1591, %v1495
  %1617 = vst [vmem:[%s4 + $0xd0] sm:$0xff] %v1496
  %1618 = vst.msk [vmem:[%s4 + $0xd8] sm:$0xff] %vm1591, %v1497
  %1619 = vst [vmem:[%s4 + $0xe0] sm:$0xff] %v1498
  %1620 = vst.msk [vmem:[%s4 + $0xe8] sm:$0xff] %vm1591, %v1499
  %1621 = vst [vmem:[%s4 + $0xf0] sm:$0xff] %v1500
  %1622 = vst.msk [vmem:[%s4 + $0xf8] sm:$0xff] %vm1591, %v1501
  %1623 = vst [vmem:[%s4 + $0x100] sm:$0xff] %v1502
  %1624 = vst.msk [vmem:[%s4 + $0x108] sm:$0xff] %vm1591, %v1503
  %1625 = vst [vmem:[%s4 + $0x110] sm:$0xff] %v1504
  %1626 = vst.msk [vmem:[%s4 + $0x118] sm:$0xff] %vm1591, %v1505
  %1627 = vst [vmem:[%s4 + $0x120] sm:$0xff] %v1506
  %1628 = vst.msk [vmem:[%s4 + $0x128] sm:$0xff] %vm1591, %v1507
  %1629 = vst [vmem:[%s4 + $0x130] sm:$0xff] %v1508
  %1630 = vst.msk [vmem:[%s4 + $0x138] sm:$0xff] %vm1591, %v1509
  %1631 = vst [vmem:[%s4 + $0x140] sm:$0xff] %v1510
  %1632 = vst.msk [vmem:[%s4 + $0x148] sm:$0xff] %vm1591, %v1511
  %1633 = vst [vmem:[%s4 + $0x150] sm:$0xff] %v1512
  %1634 = vst.msk [vmem:[%s4 + $0x158] sm:$0xff] %vm1591, %v1513
  %1635 = vst [vmem:[%s4 + $0x160] sm:$0xff] %v1514
  %1636 = vst.msk [vmem:[%s4 + $0x168] sm:$0xff] %vm1591, %v1515
  %1637 = vst [vmem:[%s4 + $0x170] sm:$0xff] %v1516
  %1638 = vst.msk [vmem:[%s4 + $0x178] sm:$0xff] %vm1591, %v1517
  %1639 = vst [vmem:[%s4 + $0x180] sm:$0xff] %v1518
  %1640 = vst.msk [vmem:[%s4 + $0x188] sm:$0xff] %vm1591, %v1519
  %1641 = vst [vmem:[%s4 + $0x190] sm:$0xff] %v1520
  %1642 = vst.msk [vmem:[%s4 + $0x198] sm:$0xff] %vm1591, %v1521
  %1643 = vst [vmem:[%s4 + $0x1a0] sm:$0xff] %v1522
  %1644 = vst.msk [vmem:[%s4 + $0x1a8] sm:$0xff] %vm1591, %v1523
  %1645 = vst [vmem:[%s4 + $0x1b0] sm:$0xff] %v1524
  %1646 = vst.msk [vmem:[%s4 + $0x1b8] sm:$0xff] %vm1591, %v1525
  %1647 = vst [vmem:[%s4 + $0x1c0] sm:$0xff] %v1526
  %1648 = vst.msk [vmem:[%s4 + $0x1c8] sm:$0xff] %vm1591, %v1527
  %1649 = vst [vmem:[%s4 + $0x1d0] sm:$0xff] %v1528
  %1650 = vst.msk [vmem:[%s4 + $0x1d8] sm:$0xff] %vm1591, %v1529
  %1651 = vst [vmem:[%s4 + $0x1e0] sm:$0xff] %v1530
  %1652 = vst.msk [vmem:[%s4 + $0x1e8] sm:$0xff] %vm1591, %v1531
  %1653 = vst [vmem:[%s4 + $0x1f0] sm:$0xff] %v1532
  %1654 = vst.msk [vmem:[%s4 + $0x1f8] sm:$0xff] %vm1591, %v1533
  %1655 = vst [vmem:[%s4 + $0x200] sm:$0xff] %v1534
  %1656 = vst.msk [vmem:[%s4 + $0x208] sm:$0xff] %vm1591, %v1535
  %1657 = vst [vmem:[%s4 + $0x210] sm:$0xff] %v1536
  %1658 = vst.msk [vmem:[%s4 + $0x218] sm:$0xff] %vm1591, %v1537
  %1659 = vst [vmem:[%s4 + $0x220] sm:$0xff] %v1538
  %1660 = vst.msk [vmem:[%s4 + $0x228] sm:$0xff] %vm1591, %v1539
  %1661 = vst [vmem:[%s4 + $0x230] sm:$0xff] %v1540
  %1662 = vst.msk [vmem:[%s4 + $0x238] sm:$0xff] %vm1591, %v1541
  %1663 = vst [vmem:[%s4 + $0x240] sm:$0xff] %v1542
  %1664 = vst.msk [vmem:[%s4 + $0x248] sm:$0xff] %vm1591, %v1543
  %1665 = vst [vmem:[%s4 + $0x250] sm:$0xff] %v1544
  %1666 = vst.msk [vmem:[%s4 + $0x258] sm:$0xff] %vm1591, %v1545
  %1667 = vst [vmem:[%s4 + $0x260] sm:$0xff] %v1546
  %1668 = vst.msk [vmem:[%s4 + $0x268] sm:$0xff] %vm1591, %v1547
  %1669 = vst [vmem:[%s4 + $0x270] sm:$0xff] %v1548
  %1670 = vst.msk [vmem:[%s4 + $0x278] sm:$0xff] %vm1591, %v1549
  %1671 = vst [vmem:[%s4 + $0x280] sm:$0xff] %v1550
  %1672 = vst.msk [vmem:[%s4 + $0x288] sm:$0xff] %vm1591, %v1551
  %1673 = vst [vmem:[%s4 + $0x290] sm:$0xff] %v1552
  %1674 = vst.msk [vmem:[%s4 + $0x298] sm:$0xff] %vm1591, %v1553
  %1675 = vst [vmem:[%s4 + $0x2a0] sm:$0xff] %v1554
  %1676 = vst.msk [vmem:[%s4 + $0x2a8] sm:$0xff] %vm1591, %v1555
  %1677 = vst [vmem:[%s4 + $0x2b0] sm:$0xff] %v1556
  %1678 = vst.msk [vmem:[%s4 + $0x2b8] sm:$0xff] %vm1591, %v1557
  %1679 = vst [vmem:[%s4 + $0x2c0] sm:$0xff] %v1558
  %1680 = vst.msk [vmem:[%s4 + $0x2c8] sm:$0xff] %vm1591, %v1559
  %1681 = vst [vmem:[%s4 + $0x2d0] sm:$0xff] %v1560
  %1682 = vst.msk [vmem:[%s4 + $0x2d8] sm:$0xff] %vm1591, %v1561
  %1683 = vst [vmem:[%s4 + $0x2e0] sm:$0xff] %v1562
  %1684 = vst.msk [vmem:[%s4 + $0x2e8] sm:$0xff] %vm1591, %v1563
  %1685 = vst [vmem:[%s4 + $0x2f0] sm:$0xff] %v1564
  %1686 = vst.msk [vmem:[%s4 + $0x2f8] sm:$0xff] %vm1591, %v1565
  %1687 = vst [vmem:[%s4 + $0x300] sm:$0xff] %v1566
  %1688 = vst.msk [vmem:[%s4 + $0x308] sm:$0xff] %vm1591, %v1567
  %1689 = vst [vmem:[%s4 + $0x310] sm:$0xff] %v1568
  %1690 = vst.msk [vmem:[%s4 + $0x318] sm:$0xff] %vm1591, %v1569
  %1691 = vst [vmem:[%s4 + $0x320] sm:$0xff] %v1570
  %1692 = vst.msk [vmem:[%s4 + $0x328] sm:$0xff] %vm1591, %v1571
  %1693 = vst [vmem:[%s4 + $0x330] sm:$0xff] %v1572
  %1694 = vst.msk [vmem:[%s4 + $0x338] sm:$0xff] %vm1591, %v1573
  %1695 = vst [vmem:[%s4 + $0x340] sm:$0xff] %v1574
  %1696 = vst.msk [vmem:[%s4 + $0x348] sm:$0xff] %vm1591, %v1575
  %1697 = vst [vmem:[%s4 + $0x350] sm:$0xff] %v1576
  %1698 = vst.msk [vmem:[%s4 + $0x358] sm:$0xff] %vm1591, %v1577
  %1699 = vst [vmem:[%s4 + $0x360] sm:$0xff] %v1578
  %1700 = vst.msk [vmem:[%s4 + $0x368] sm:$0xff] %vm1591, %v1579
  %1701 = vst [vmem:[%s4 + $0x370] sm:$0xff] %v1580
  %1702 = vst.msk [vmem:[%s4 + $0x378] sm:$0xff] %vm1591, %v1581
  %1703 = vst [vmem:[%s4 + $0x380] sm:$0xff] %v1582
  %1704 = vst.msk [vmem:[%s4 + $0x388] sm:$0xff] %vm1591, %v1583
  %1705 = vst [vmem:[%s4 + $0x390] sm:$0xff] %v1584
  %1706 = vst.msk [vmem:[%s4 + $0x398] sm:$0xff] %vm1591, %v1585
  %1707 = vst [vmem:[%s4 + $0x3a0] sm:$0xff] %v1586
  %1708 = vst.msk [vmem:[%s4 + $0x3a8] sm:$0xff] %vm1591, %v1587
  %1709 = vst [vmem:[%s4 + $0x3b0] sm:$0xff] %v1588
  %1710 = vst.msk [vmem:[%s4 + $0x3b8] sm:$0xff] %vm1591, %v1589
  // Predicated region
  $region18: #{se_conv_sigmoid_mul.1} parent=0 // pred_check
    _
  $region19: #{se_conv_sigmoid_mul.1} parent=0 // pred_check_branch
    %1712 = sbr.rel (0) target = $region21
  $region20: #{se_conv_sigmoid_mul.1} parent=0 // pred_region
    _
  $region21: #{se_conv_sigmoid_mul.1} parent=0 // pred_fallthru
    _
  // Predicated region
  $region22: #{se_conv_sigmoid_mul.1} parent=0 // pred_check
    _
  $region23: #{se_conv_sigmoid_mul.1} parent=0 // pred_check_branch
    %1714 = sbr.rel (0) target = $region25
  $region24: #{se_conv_sigmoid_mul.1} parent=0 // pred_region
    _
  $region25: #{se_conv_sigmoid_mul.1} parent=0 // pred_fallthru
    _

</llo_original>
